<compile_context>
chip_gen: v6e
topology: v6e:2x2x1
jax: 0.10.0
libtpu: 0.0.40
codegen_flags: <defaults>
</compile_context>

<pallas_src>
import jax
import jax.numpy as jnp
from jax.experimental import pallas as pl
from jax.experimental.pallas import tpu as pltpu

_LANE = 128
_SUBLANE = 8


def _round_up(x: int, m: int) -> int:
    return ((x + m - 1) // m) * m


def _mlp_kernel(x_ref, w1_ref, b1_ref, w2_ref, b2_ref, out_ref):
    """One batch tile: q = relu(x @ w1 + b1) @ w2 + b2 (feature dims pre-padded to 128 lanes)."""
    x = x_ref[...]                               # (TB, In)   float32
    w1 = w1_ref[...]                             # (In, HP)   float32
    in_size = x.shape[1]                         # static

    # fc1: tiny contraction (K = input_size ~ 5) -> broadcast FMAs on the VPU instead of
    # wasting a full MXU push/pop on a 5/128-row systolic pass.  Static Python loop.
    if in_size <= 16:
        h = b1_ref[...] + x[:, 0:1] * w1[0:1, :]
        for k in range(1, in_size):
            h = h + x[:, k:k + 1] * w1[k:k + 1, :]
    else:  # fallback for larger input sizes: regular MXU matmul
        h = jnp.dot(x, w1, preferred_element_type=jnp.float32) + b1_ref[...]

    h = jnp.maximum(h, 0.0)                      # ReLU, (TB, HP) f32

    # fc2 on the MXU: bf16 operands, f32 accumulation.  Output tile is lane-dense
    # (last dim = 128) so stores are unmasked.
    q = jnp.dot(h.astype(w2_ref.dtype), w2_ref[...],
                preferred_element_type=jnp.float32)
    q = q + b2_ref[...]
    out_ref[...] = q.astype(out_ref.dtype)


def network_forward(state, w1, b1, w2, b2, *, block_batch: int = 512):
    """Pallas forward pass: q_values = relu(state @ w1 + b1) @ w2 + b2.

    state: (B, input_size) f32.  w1: (input_size, hidden), b1: (1, hidden) or (hidden,),
    w2: (hidden, nb_action), b2: (1, nb_action) or (nb_action,).
    """
    state = jnp.asarray(state, jnp.float32)
    batch, in_size = state.shape
    hidden = w1.shape[1]
    nb_action = w2.shape[1]

    # ---- Batch tiling (grid over batch rows; weights stay VMEM-resident). ----
    tb = min(block_batch, _round_up(batch, _SUBLANE))      # multiple of 8
    bp = _round_up(batch, tb)
    if bp != batch:
        state = jnp.pad(state, ((0, bp - batch), (0, 0)))

    # ---- Lane-dense padding of the feature dims (zeros, so values are unchanged). ----
    hp = _round_up(hidden, _LANE)
    ap = _round_up(nb_action, _LANE)
    w1p = jnp.pad(jnp.asarray(w1, jnp.float32), ((0, 0), (0, hp - hidden)))
    b1p = jnp.pad(jnp.asarray(b1, jnp.float32).reshape(1, hidden),
                  ((0, 0), (0, hp - hidden)))
    w2p = jnp.pad(jnp.asarray(w2, jnp.float32),
                  ((0, hp - hidden), (0, ap - nb_action))).astype(jnp.bfloat16)
    b2p = jnp.pad(jnp.asarray(b2, jnp.float32).reshape(1, nb_action),
                  ((0, 0), (0, ap - nb_action)))

    cost = pl.CostEstimate(
        flops=2 * batch * (in_size * hidden + hidden * nb_action),
        transcendentals=0,
        bytes_accessed=4 * (batch * in_size + batch * nb_action
                            + in_size * hidden + hidden
                            + hidden * nb_action + nb_action),
    )

    out_padded = pl.pallas_call(
        _mlp_kernel,
        out_shape=jax.ShapeDtypeStruct((bp, ap), jnp.float32),
        grid=(bp // tb,),
        in_specs=[
            pl.BlockSpec((tb, in_size), lambda i: (i, 0)),   # state: tiled over batch
            pl.BlockSpec((in_size, hp), lambda i: (0, 0)),   # w1: resident
            pl.BlockSpec((1, hp),       lambda i: (0, 0)),   # b1: resident
            pl.BlockSpec((hp, ap),      lambda i: (0, 0)),   # w2: resident (bf16)
            pl.BlockSpec((1, ap),       lambda i: (0, 0)),   # b2: resident
        ],
        out_specs=pl.BlockSpec((tb, ap), lambda i: (i, 0)),
        compiler_params=pltpu.CompilerParams(
            dimension_semantics=("parallel",)),
        cost_estimate=cost,
    )(state, w1p, b1p, w2p, b2p)

    return out_padded[:batch, :nb_action]


def init_params(key, input_size: int, nb_action: int, hidden: int = 64):
    """Deterministic init mimicking PyTorch nn.Linear default U[-1/sqrt(fan_in), 1/sqrt(fan_in)].

    Weights are stored as (in_features, out_features) = transpose of PyTorch layout.
    """
    k1, k2, k3, k4 = jax.random.split(key, 4)
    bound1 = 1.0 / jnp.sqrt(input_size)
    bound2 = 1.0 / jnp.sqrt(hidden)
    w1 = jax.random.uniform(k1, (input_size, hidden), jnp.float32, -bound1, bound1)
    b1 = jax.random.uniform(k2, (1, hidden), jnp.float32, -bound1, bound1)
    w2 = jax.random.uniform(k3, (hidden, nb_action), jnp.float32, -bound2, bound2)
    b2 = jax.random.uniform(k4, (1, nb_action), jnp.float32, -bound2, bound2)
    return w1, b1, w2, b2


def network_forward_ref(state, w1, b1, w2, b2):
    """Pure-JAX, full-f32 reference of the PyTorch forward semantics."""
    hi = jax.lax.Precision.HIGHEST
    h = jnp.maximum(jnp.dot(state, w1, precision=hi) + b1.reshape(1, -1), 0.0)
    return jnp.dot(h, w2, precision=hi) + b2.reshape(1, -1)


def network_forward_ref_kernel_numerics(state, w1, b1, w2, b2):
    """Reference mirroring the kernel's numerics (bf16 operands on fc2, f32 accumulation)."""
    hi = jax.lax.Precision.HIGHEST
    h = jnp.maximum(jnp.dot(state, w1, precision=hi) + b1.reshape(1, -1), 0.0)
    h16 = h.astype(jnp.bfloat16).astype(jnp.float32)
    w216 = w2.astype(jnp.bfloat16).astype(jnp.float32)
    return jnp.dot(h16, w216, precision=hi) + b2.reshape(1, -1)


if __name__ == "__main__":
    input_size, nb_action, hidden = 5, 3, 64

    key = jax.random.PRNGKey(0)
    k_params, k_state = jax.random.split(key)
    w1, b1, w2, b2 = init_params(k_params, input_size, nb_action, hidden)

    # (a) Training-batch sized call: exercises batch padding (1000 -> 1024), two grid
    #     steps of 512 rows, resident weights, and the lane-dense padded output.
    batch = 1000
    state = jax.random.normal(k_state, (batch, input_size), jnp.float32)
    q = jax.block_until_ready(network_forward(state, w1, b1, w2, b2))
    assert q.shape == (batch, nb_action)

    q_ref_mixed = network_forward_ref_kernel_numerics(state, w1, b1, w2, b2)
    assert jnp.allclose(q, q_ref_mixed, atol=1e-4, rtol=1e-4)
    q_ref_f32 = network_forward_ref(state, w1, b1, w2, b2)
    assert float(jnp.max(jnp.abs(q - q_ref_f32))) < 5e-2  # bf16-operand fc2 tolerance

    # (b) Tiny act()-style call (single 8-row block).  Correct, though at this size the
    #     call is dispatch-bound; the kernel is really meant for the training-batch path.
    state_small = jax.random.normal(jax.random.PRNGKey(7), (8, input_size), jnp.float32)
    q_small = jax.block_until_ready(network_forward(state_small, w1, b1, w2, b2))
    assert q_small.shape == (8, nb_action)
    assert jnp.allclose(
        q_small,
        network_forward_ref_kernel_numerics(state_small, w1, b1, w2, b2),
        atol=1e-4, rtol=1e-4)

    print("KERNEL_OK")
</pallas_src>

<mosaic_0001>
module attributes {stable_mosaic.version = 11 : i64} {
  func.func @_mlp_kernel(%arg0: i32, %arg1: memref<512x5xf32, #tpu.memory_space<vmem>>, %arg2: memref<5x128xf32, #tpu.memory_space<vmem>>, %arg3: memref<1x128xf32, #tpu.memory_space<vmem>>, %arg4: memref<128x128xbf16, #tpu.memory_space<vmem>>, %arg5: memref<1x128xf32, #tpu.memory_space<vmem>>, %arg6: memref<512x128xf32, #tpu.memory_space<vmem>>) attributes {dimension_semantics = [#tpu.dimension_semantics<parallel>], iteration_bounds = array<i64: 2>, scalar_prefetch = 0 : i64, scratch_operands = 0 : i64, tpu.core_type = #tpu.core_type<tc>, window_params = [{transform_indices = @transform_0, window_bounds = array<i64: 512, 5>}, {pipeline_mode = #tpu.pipeline_mode<synchronous>, transform_indices = @transform_1, window_bounds = array<i64: 5, 128>}, {pipeline_mode = #tpu.pipeline_mode<synchronous>, transform_indices = @transform_2, window_bounds = array<i64: 1, 128>}, {pipeline_mode = #tpu.pipeline_mode<synchronous>, transform_indices = @transform_3, window_bounds = array<i64: 128, 128>}, {pipeline_mode = #tpu.pipeline_mode<synchronous>, transform_indices = @transform_4, window_bounds = array<i64: 1, 128>}, {transform_indices = @transform_5, window_bounds = array<i64: 512, 128>}]} {
    %c0 = arith.constant 0 : index
    %c0_0 = arith.constant 0 : index
    %0 = vector.load %arg1[%c0, %c0_0] : memref<512x5xf32, #tpu.memory_space<vmem>>, vector<512x5xf32>
    %c0_1 = arith.constant 0 : index
    %c0_2 = arith.constant 0 : index
    %1 = vector.load %arg2[%c0_1, %c0_2] : memref<5x128xf32, #tpu.memory_space<vmem>>, vector<5x128xf32>
    %c0_3 = arith.constant 0 : index
    %c0_4 = arith.constant 0 : index
    %2 = vector.load %arg3[%c0_3, %c0_4] : memref<1x128xf32, #tpu.memory_space<vmem>>, vector<1x128xf32>
    %3 = vector.extract_strided_slice %0 {offsets = [0, 0], sizes = [512, 1], strides = [1, 1]} : vector<512x5xf32> to vector<512x1xf32>
    %4 = vector.extract_strided_slice %1 {offsets = [0, 0], sizes = [1, 128], strides = [1, 1]} : vector<5x128xf32> to vector<1x128xf32>
    %5 = vector.broadcast %3 : vector<512x1xf32> to vector<512x128xf32>
    %6 = vector.broadcast %4 : vector<1x128xf32> to vector<512x128xf32>
    %7 = arith.mulf %5, %6 : vector<512x128xf32>
    %8 = vector.broadcast %2 : vector<1x128xf32> to vector<512x128xf32>
    %9 = arith.addf %8, %7 : vector<512x128xf32>
    %10 = vector.extract_strided_slice %0 {offsets = [0, 1], sizes = [512, 1], strides = [1, 1]} : vector<512x5xf32> to vector<512x1xf32>
    %11 = vector.extract_strided_slice %1 {offsets = [1, 0], sizes = [1, 128], strides = [1, 1]} : vector<5x128xf32> to vector<1x128xf32>
    %12 = vector.broadcast %10 : vector<512x1xf32> to vector<512x128xf32>
    %13 = vector.broadcast %11 : vector<1x128xf32> to vector<512x128xf32>
    %14 = arith.mulf %12, %13 : vector<512x128xf32>
    %15 = arith.addf %9, %14 : vector<512x128xf32>
    %16 = vector.extract_strided_slice %0 {offsets = [0, 2], sizes = [512, 1], strides = [1, 1]} : vector<512x5xf32> to vector<512x1xf32>
    %17 = vector.extract_strided_slice %1 {offsets = [2, 0], sizes = [1, 128], strides = [1, 1]} : vector<5x128xf32> to vector<1x128xf32>
    %18 = vector.broadcast %16 : vector<512x1xf32> to vector<512x128xf32>
    %19 = vector.broadcast %17 : vector<1x128xf32> to vector<512x128xf32>
    %20 = arith.mulf %18, %19 : vector<512x128xf32>
    %21 = arith.addf %15, %20 : vector<512x128xf32>
    %22 = vector.extract_strided_slice %0 {offsets = [0, 3], sizes = [512, 1], strides = [1, 1]} : vector<512x5xf32> to vector<512x1xf32>
    %23 = vector.extract_strided_slice %1 {offsets = [3, 0], sizes = [1, 128], strides = [1, 1]} : vector<5x128xf32> to vector<1x128xf32>
    %24 = vector.broadcast %22 : vector<512x1xf32> to vector<512x128xf32>
    %25 = vector.broadcast %23 : vector<1x128xf32> to vector<512x128xf32>
    %26 = arith.mulf %24, %25 : vector<512x128xf32>
    %27 = arith.addf %21, %26 : vector<512x128xf32>
    %28 = vector.extract_strided_slice %0 {offsets = [0, 4], sizes = [512, 1], strides = [1, 1]} : vector<512x5xf32> to vector<512x1xf32>
    %29 = vector.extract_strided_slice %1 {offsets = [4, 0], sizes = [1, 128], strides = [1, 1]} : vector<5x128xf32> to vector<1x128xf32>
    %30 = vector.broadcast %28 : vector<512x1xf32> to vector<512x128xf32>
    %31 = vector.broadcast %29 : vector<1x128xf32> to vector<512x128xf32>
    %32 = arith.mulf %30, %31 : vector<512x128xf32>
    %33 = arith.addf %27, %32 : vector<512x128xf32>
    %cst = arith.constant 0.000000e+00 : f32
    %34 = vector.broadcast %cst : f32 to vector<512x128xf32>
    %35 = arith.maximumf %33, %34 : vector<512x128xf32>
    %36 = arith.truncf %35 : vector<512x128xf32> to vector<512x128xbf16>
    %c0_5 = arith.constant 0 : index
    %c0_6 = arith.constant 0 : index
    %37 = vector.load %arg4[%c0_5, %c0_6] : memref<128x128xbf16, #tpu.memory_space<vmem>>, vector<128x128xbf16>
    %cst_7 = arith.constant dense<0.000000e+00> : vector<512x128xf32>
    %38 = tpu.matmul %36, %37, %cst_7 {dimension_numbers = #tpu.dot_dimension_numbers<[1], [0], [0], [1], [0, 0, 1, 1], [], []>} : vector<512x128xbf16>, vector<128x128xbf16>, vector<512x128xf32> -> vector<512x128xf32>
    %c0_8 = arith.constant 0 : index
    %c0_9 = arith.constant 0 : index
    %39 = vector.load %arg5[%c0_8, %c0_9] : memref<1x128xf32, #tpu.memory_space<vmem>>, vector<1x128xf32>
    %40 = vector.broadcast %39 : vector<1x128xf32> to vector<512x128xf32>
    %41 = arith.addf %38, %40 : vector<512x128xf32>
    %c0_10 = arith.constant 0 : index
    %c0_11 = arith.constant 0 : index
    %42 = vector.load %arg6[%c0_10, %c0_11] : memref<512x128xf32, #tpu.memory_space<vmem>>, vector<512x128xf32>
    tpu.vector_store %arg6[%c0_10, %c0_11], %41 {strides = array<i32>} : memref<512x128xf32, #tpu.memory_space<vmem>>, vector<512x128xf32>,
    return
  }
  func.func @transform_0(%arg0: i32) -> (i32, i32) {
    %c0_i32 = arith.constant 0 : i32
    %c0_i32_0 = arith.constant 0 : i32
    return %arg0, %c0_i32 : i32, i32
  }
  func.func @transform_1(%arg0: i32) -> (i32, i32) {
    %c0_i32 = arith.constant 0 : i32
    %c0_i32_0 = arith.constant 0 : i32
    %c0_i32_1 = arith.constant 0 : i32
    return %c0_i32, %c0_i32_0 : i32, i32
  }
  func.func @transform_2(%arg0: i32) -> (i32, i32) {
    %c0_i32 = arith.constant 0 : i32
    %c0_i32_0 = arith.constant 0 : i32
    %c0_i32_1 = arith.constant 0 : i32
    return %c0_i32, %c0_i32_0 : i32, i32
  }
  func.func @transform_3(%arg0: i32) -> (i32, i32) {
    %c0_i32 = arith.constant 0 : i32
    %c0_i32_0 = arith.constant 0 : i32
    %c0_i32_1 = arith.constant 0 : i32
    return %c0_i32, %c0_i32_0 : i32, i32
  }
  func.func @transform_4(%arg0: i32) -> (i32, i32) {
    %c0_i32 = arith.constant 0 : i32
    %c0_i32_0 = arith.constant 0 : i32
    %c0_i32_1 = arith.constant 0 : i32
    return %c0_i32, %c0_i32_0 : i32, i32
  }
  func.func @transform_5(%arg0: i32) -> (i32, i32) {
    %c0_i32 = arith.constant 0 : i32
    %c0_i32_0 = arith.constant 0 : i32
    return %arg0, %c0_i32 : i32, i32
  }
}

</mosaic_0001>

<llo_original>
// kernel: tpu_custom_call.1
$region0: #{tpu_custom_call.1}
  #allocation0 [shape = 'u32[]', space=smem, size = 0x4, offset = 0x4, fixed_abs, tag = 'smem constant byte address 0x4 - core index']
  #allocation1 [shape = 'u32[144,128]{1,0:T(1,128)}', space=vmem, size = 0x12000, scoped, tag = 'internal scratch']
  %s0 = inlined_call_operand.vmem [shape: f32[1024,5], index: 0, kind: input, shape index: {}]
  %s1 = inlined_call_operand.vmem [shape: f32[5,128], index: 1, kind: input, shape index: {}]
  %s2 = inlined_call_operand.vmem [shape: f32[1,128], index: 2, kind: input, shape index: {}]
  %s3 = inlined_call_operand.vmem [shape: bf16[128,128], index: 3, kind: input, shape index: {}]
  %s4 = inlined_call_operand.vmem [shape: f32[1,128], index: 4, kind: input, shape index: {}]
  %s5 = inlined_call_operand.hbm [shape: f32[1024,128], index: 5, kind: output, shape index: {}]
  %s6 = sld [smem:[#allocation0]]
  $region53: #{tpu_custom_call.1} parent=0
    _
  %s8 = ssub.s32 1, %s6
  %s9 = scalar_select 0, %s8, %s6
  $region1: #{tpu_custom_call.1} parent=0
    #allocation2 [shape = 'u8[524288]{0}', space=vmem, size = 0x80000, scoped, tag = 'output window, operand 0']
    #allocation3 [shape = 's32[2]{0}', space=sflag, size = 0x8, scoped, tag = 'scoped memory for tpu_custom_call.1']
    %10 = vsyncpa [#allocation3], 0
    %s11 = scalar_lea.sflag [#allocation3], 1
    %12 = vsyncpa %s11, 0
    loop: start=0, step=1, limit=4
    $region2: #{tpu_custom_call.1} parent=1 // loop_pre_header
      _
    $region3: #{tpu_custom_call.1} parent=1 // loop_header
      %s14 = sphi 0, %s18
      %p15 = scmp.ge.s32.totalorder %s14, 4
      %s24 = sphi 0, %s26
      %s27 = sphi 0, %s24
      %s28 = sphi 0, %s27
      %s44 = sphi 0, %s28
      %s48 = sphi 0, %s48
      %s50 = sphi 0, %s48
      %s51 = sphi 0, %s50
      %s65 = sphi 0, %s51
      %s69 = sphi 0, %s69
      %s71 = sphi 0, %s69
      %s72 = sphi 0, %s71
      %s86 = sphi 0, %s72
      %s90 = sphi 0, %s90
      %s92 = sphi 0, %s90
      %s93 = sphi 0, %s92
      %s107 = sphi 0, %s93
      %s111 = sphi 0, %s111
      %s113 = sphi 0, %s111
      %s114 = sphi 0, %s113
      %s128 = sphi 0, %s114
      %s134 = sphi 0, %s136
      %s137 = sphi 0, %s134
      %s138 = sphi 0, %s137
      %s154 = sphi 0, %s138
    $region4: #{tpu_custom_call.1} parent=1 // loop_header_branch
      %17 = sbr.rel (%p15) target = $region8
    $region5: #{tpu_custom_call.1} parent=1 // loop_body
      %s19 = ssub.s32 %s14, 1
      %s20 = ssub.s32 %s14, 2
      %s21 = sadd.s32 %s14, 1
      %s22 = ssub.s32 %s14, %s21
      %p23 = scmp.eq.s32.totalorder %s22, 0
      %s25 = sadd.s32 %s24, 1
      %s26 = scalar_select %p23, %s24, %s25
      %p29 = pneg %p23
      %p30 = scmp.eq.s32.totalorder %s14, 1
      %p31 = por %p29, %p30
      %p32 = scmp.ne.s32.totalorder %s24, %s27
      %p33 = scmp.eq.s32.totalorder %s14, 0
      %p34 = por %p32, %p33
      %p35 = scmp.ne.s32.totalorder %s24, %s27
      %p36 = scmp.eq.s32.totalorder %s19, 1
      %p37 = por %p35, %p36
      %p38 = scmp.ne.s32.totalorder %s27, %s28
      %p39 = scmp.eq.s32.totalorder %s19, 0
      %p40 = por %p38, %p39
      %p41 = scmp.ne.s32.totalorder %s27, %s28
      %p42 = scmp.eq.s32.totalorder %s20, 1
      %p43 = por %p41, %p42
      %p45 = scmp.ne.s32.totalorder %s28, %s44
      %p46 = scmp.eq.s32.totalorder %s20, 0
      %p47 = por %p45, %p46
      %s49 = sadd.s32 %s48, 1
      %p52 = scmp.eq.s32.totalorder %s14, 1
      %p53 = scmp.ne.s32.totalorder %s48, %s50
      %p54 = scmp.eq.s32.totalorder %s14, 0
      %p55 = por %p53, %p54
      %p56 = scmp.ne.s32.totalorder %s48, %s50
      %p57 = scmp.eq.s32.totalorder %s19, 1
      %p58 = por %p56, %p57
      %p59 = scmp.ne.s32.totalorder %s50, %s51
      %p60 = scmp.eq.s32.totalorder %s19, 0
      %p61 = por %p59, %p60
      %p62 = scmp.ne.s32.totalorder %s50, %s51
      %p63 = scmp.eq.s32.totalorder %s20, 1
      %p64 = por %p62, %p63
      %p66 = scmp.ne.s32.totalorder %s51, %s65
      %p67 = scmp.eq.s32.totalorder %s20, 0
      %p68 = por %p66, %p67
      %s70 = sadd.s32 %s69, 1
      %p73 = scmp.eq.s32.totalorder %s14, 1
      %p74 = scmp.ne.s32.totalorder %s69, %s71
      %p75 = scmp.eq.s32.totalorder %s14, 0
      %p76 = por %p74, %p75
      %p77 = scmp.ne.s32.totalorder %s69, %s71
      %p78 = scmp.eq.s32.totalorder %s19, 1
      %p79 = por %p77, %p78
      %p80 = scmp.ne.s32.totalorder %s71, %s72
      %p81 = scmp.eq.s32.totalorder %s19, 0
      %p82 = por %p80, %p81
      %p83 = scmp.ne.s32.totalorder %s71, %s72
      %p84 = scmp.eq.s32.totalorder %s20, 1
      %p85 = por %p83, %p84
      %p87 = scmp.ne.s32.totalorder %s72, %s86
      %p88 = scmp.eq.s32.totalorder %s20, 0
      %p89 = por %p87, %p88
      %s91 = sadd.s32 %s90, 1
      %p94 = scmp.eq.s32.totalorder %s14, 1
      %p95 = scmp.ne.s32.totalorder %s90, %s92
      %p96 = scmp.eq.s32.totalorder %s14, 0
      %p97 = por %p95, %p96
      %p98 = scmp.ne.s32.totalorder %s90, %s92
      %p99 = scmp.eq.s32.totalorder %s19, 1
      %p100 = por %p98, %p99
      %p101 = scmp.ne.s32.totalorder %s92, %s93
      %p102 = scmp.eq.s32.totalorder %s19, 0
      %p103 = por %p101, %p102
      %p104 = scmp.ne.s32.totalorder %s92, %s93
      %p105 = scmp.eq.s32.totalorder %s20, 1
      %p106 = por %p104, %p105
      %p108 = scmp.ne.s32.totalorder %s93, %s107
      %p109 = scmp.eq.s32.totalorder %s20, 0
      %p110 = por %p108, %p109
      %s112 = sadd.s32 %s111, 1
      %p115 = scmp.eq.s32.totalorder %s14, 1
      %p116 = scmp.ne.s32.totalorder %s111, %s113
      %p117 = scmp.eq.s32.totalorder %s14, 0
      %p118 = por %p116, %p117
      %p119 = scmp.ne.s32.totalorder %s111, %s113
      %p120 = scmp.eq.s32.totalorder %s19, 1
      %p121 = por %p119, %p120
      %p122 = scmp.ne.s32.totalorder %s113, %s114
      %p123 = scmp.eq.s32.totalorder %s19, 0
      %p124 = por %p122, %p123
      %p125 = scmp.ne.s32.totalorder %s113, %s114
      %p126 = scmp.eq.s32.totalorder %s20, 1
      %p127 = por %p125, %p126
      %p129 = scmp.ne.s32.totalorder %s114, %s128
      %p130 = scmp.eq.s32.totalorder %s20, 0
      %p131 = por %p129, %p130
      %s132 = ssub.s32 %s14, %s21
      %p133 = scmp.eq.s32.totalorder %s132, 0
      %s135 = sadd.s32 %s134, 1
      %s136 = scalar_select %p133, %s134, %s135
      %p139 = pneg %p133
      %p140 = scmp.eq.s32.totalorder %s14, 1
      %p141 = por %p139, %p140
      %p142 = scmp.ne.s32.totalorder %s134, %s137
      %p143 = scmp.eq.s32.totalorder %s14, 0
      %p144 = por %p142, %p143
      %p145 = scmp.ne.s32.totalorder %s134, %s137
      %p146 = scmp.eq.s32.totalorder %s19, 1
      %p147 = por %p145, %p146
      %p148 = scmp.ne.s32.totalorder %s137, %s138
      %p149 = scmp.eq.s32.totalorder %s19, 0
      %p150 = por %p148, %p149
      %p151 = scmp.ne.s32.totalorder %s137, %s138
      %p152 = scmp.eq.s32.totalorder %s20, 1
      %p153 = por %p151, %p152
      %p155 = scmp.ne.s32.totalorder %s138, %s154
      %p156 = scmp.eq.s32.totalorder %s20, 0
      %p157 = por %p155, %p156
      %p158 = scmp.le.s32.totalorder 1, %s14
      %p159 = scmp.lt.s32.totalorder %s14, 3
      %p160 = pnand %p158, %p159
      %p161 = pneg %p160
      // Predicated region
      $region9: #{tpu_custom_call.1} parent=5 // pred_check
        _
      $region10: #{tpu_custom_call.1} parent=5 // pred_check_branch
        %163 = sbr.rel (%p160) target = $region12
      $region11: #{tpu_custom_call.1} parent=5 // pred_region
        %s164 = ssub.s32 %s14, 1
        // Predicated region
        $region13: #{tpu_custom_call.1} parent=11 // pred_check
          %p165 = pneg %p61
        $region14: #{tpu_custom_call.1} parent=11 // pred_check_branch
          %167 = sbr.rel (%p165) target = $region16
        $region15: #{tpu_custom_call.1} parent=11 // pred_region
          _
        $region16: #{tpu_custom_call.1} parent=11 // pred_fallthru
          _
        // Predicated region
        $region17: #{tpu_custom_call.1} parent=11 // pred_check
          %p168 = pneg %p82
        $region18: #{tpu_custom_call.1} parent=11 // pred_check_branch
          %170 = sbr.rel (%p168) target = $region20
        $region19: #{tpu_custom_call.1} parent=11 // pred_region
          _
        $region20: #{tpu_custom_call.1} parent=11 // pred_fallthru
          _
        // Predicated region
        $region21: #{tpu_custom_call.1} parent=11 // pred_check
          %p171 = pneg %p103
        $region22: #{tpu_custom_call.1} parent=11 // pred_check_branch
          %173 = sbr.rel (%p171) target = $region24
        $region23: #{tpu_custom_call.1} parent=11 // pred_region
          _
        $region24: #{tpu_custom_call.1} parent=11 // pred_fallthru
          _
        // Predicated region
        $region25: #{tpu_custom_call.1} parent=11 // pred_check
          %p174 = pneg %p124
        $region26: #{tpu_custom_call.1} parent=11 // pred_check_branch
          %176 = sbr.rel (%p174) target = $region28
        $region27: #{tpu_custom_call.1} parent=11 // pred_region
          _
        $region28: #{tpu_custom_call.1} parent=11 // pred_fallthru
          _
      $region12: #{tpu_custom_call.1} parent=5 // pred_fallthru
        _
      %p177 = scmp.lt.s32.totalorder %s14, 2
      // Predicated region
      $region29: #{tpu_custom_call.1} parent=5 // pred_check
        %p178 = pneg %p177
      $region30: #{tpu_custom_call.1} parent=5 // pred_check_branch
        %180 = sbr.rel (%p178) target = $region32
      $region31: #{tpu_custom_call.1} parent=5 // pred_region
        // Predicated region
        $region33: #{tpu_custom_call.1} parent=31 // pred_check
          %p181 = pneg %p34
        $region34: #{tpu_custom_call.1} parent=31 // pred_check_branch
          %183 = sbr.rel (%p181) target = $region36
        $region35: #{tpu_custom_call.1} parent=31 // pred_region
          %s184 = smul.u32 64, %s14
          %p185 = scmp.lt.s32.totalorder %s184, 127
          %s186 = scalar_select %p185, %s184, 127
          %s187 = smul.addr %s186, 8
          %s188 = scalar_lea.vmem %s0, %s187
          %s189 = smul.u32 64, %s14
        $region36: #{tpu_custom_call.1} parent=31 // pred_fallthru
          _
      $region32: #{tpu_custom_call.1} parent=5 // pred_fallthru
        _
      %p190 = scmp.le.s32.totalorder 1, %s14
      %p191 = scmp.lt.s32.totalorder %s14, 3
      %p192 = pnand %p190, %p191
      %p193 = pneg %p192
      // Predicated region
      $region37: #{tpu_custom_call.1} parent=5 // pred_check
        _
      $region38: #{tpu_custom_call.1} parent=5 // pred_check_branch
        %195 = sbr.rel (%p192) target = $region40
      $region39: #{tpu_custom_call.1} parent=5 // pred_region
        %s196 = ssub.s32 %s14, 1
        %s197 = smul.u32 64, %s19
        %p198 = scmp.lt.s32.totalorder %s197, 127
        %s199 = scalar_select %p198, %s197, 127
        %s200 = smul.addr %s199, 8
        %s201 = scalar_lea.vmem %s0, %s200
        %p202 = pneg %p40
        %p203 = pneg %p37
        %p204 = pneg %p61
        %p205 = pneg %p58
        %p206 = pneg %p82
        %p207 = pneg %p79
        %p208 = pneg %p103
        %p209 = pneg %p100
        %p210 = pneg %p124
        %p211 = pneg %p121
        %p212 = pneg %p150
        %p213 = pneg %p147
        %s214 = sand.u32 %s137, 1
        %s215 = scalar_lea.sflag [#allocation3], %s214
        %s216 = sand.u32 %s137, 1
        %s217 = smul.addr %s216, 512
        %s218 = scalar_lea.vmem [#allocation2], %s217
        %s219 = smul.u32 64, %s19
        %p220 = scmp.lt.s32.totalorder %s219, 127
        %s221 = scalar_select %p220, %s219, 127
        %s222 = smul.addr %s221, 8
        %s223 = scalar_lea.vmem %s0, %s222
        %s224 = smul.u32 64, %s19
        %s225 = smul.u32 64, %s19
        %v227 = vld [vmem:[%s223] sm:$0xff]
        %v228 = vld [vmem:[%s223 + $0x8] sm:$0xff]
        %v229 = vld [vmem:[%s223 + $0x10] sm:$0xff]
        %v230 = vld [vmem:[%s223 + $0x18] sm:$0xff]
        %v231 = vld [vmem:[%s223 + $0x20] sm:$0xff]
        %v232 = vld [vmem:[%s223 + $0x28] sm:$0xff]
        %v233 = vld [vmem:[%s223 + $0x30] sm:$0xff]
        %v234 = vld [vmem:[%s223 + $0x38] sm:$0xff]
        %v235 = vld [vmem:[%s223 + $0x40] sm:$0xff]
        %v236 = vld [vmem:[%s223 + $0x48] sm:$0xff]
        %v237 = vld [vmem:[%s223 + $0x50] sm:$0xff]
        %v238 = vld [vmem:[%s223 + $0x58] sm:$0xff]
        %v239 = vld [vmem:[%s223 + $0x60] sm:$0xff]
        %v240 = vld [vmem:[%s223 + $0x68] sm:$0xff]
        %v241 = vld [vmem:[%s223 + $0x70] sm:$0xff]
        %v242 = vld [vmem:[%s223 + $0x78] sm:$0xff]
        %v243 = vld [vmem:[%s223 + $0x80] sm:$0xff]
        %v244 = vld [vmem:[%s223 + $0x88] sm:$0xff]
        %v245 = vld [vmem:[%s223 + $0x90] sm:$0xff]
        %v246 = vld [vmem:[%s223 + $0x98] sm:$0xff]
        %v247 = vld [vmem:[%s223 + $0xa0] sm:$0xff]
        %v248 = vld [vmem:[%s223 + $0xa8] sm:$0xff]
        %v249 = vld [vmem:[%s223 + $0xb0] sm:$0xff]
        %v250 = vld [vmem:[%s223 + $0xb8] sm:$0xff]
        %v251 = vld [vmem:[%s223 + $0xc0] sm:$0xff]
        %v252 = vld [vmem:[%s223 + $0xc8] sm:$0xff]
        %v253 = vld [vmem:[%s223 + $0xd0] sm:$0xff]
        %v254 = vld [vmem:[%s223 + $0xd8] sm:$0xff]
        %v255 = vld [vmem:[%s223 + $0xe0] sm:$0xff]
        %v256 = vld [vmem:[%s223 + $0xe8] sm:$0xff]
        %v257 = vld [vmem:[%s223 + $0xf0] sm:$0xff]
        %v258 = vld [vmem:[%s223 + $0xf8] sm:$0xff]
        %v259 = vld [vmem:[%s223 + $0x100] sm:$0xff]
        %v260 = vld [vmem:[%s223 + $0x108] sm:$0xff]
        %v261 = vld [vmem:[%s223 + $0x110] sm:$0xff]
        %v262 = vld [vmem:[%s223 + $0x118] sm:$0xff]
        %v263 = vld [vmem:[%s223 + $0x120] sm:$0xff]
        %v264 = vld [vmem:[%s223 + $0x128] sm:$0xff]
        %v265 = vld [vmem:[%s223 + $0x130] sm:$0xff]
        %v266 = vld [vmem:[%s223 + $0x138] sm:$0xff]
        %v267 = vld [vmem:[%s223 + $0x140] sm:$0xff]
        %v268 = vld [vmem:[%s223 + $0x148] sm:$0xff]
        %v269 = vld [vmem:[%s223 + $0x150] sm:$0xff]
        %v270 = vld [vmem:[%s223 + $0x158] sm:$0xff]
        %v271 = vld [vmem:[%s223 + $0x160] sm:$0xff]
        %v272 = vld [vmem:[%s223 + $0x168] sm:$0xff]
        %v273 = vld [vmem:[%s223 + $0x170] sm:$0xff]
        %v274 = vld [vmem:[%s223 + $0x178] sm:$0xff]
        %v275 = vld [vmem:[%s223 + $0x180] sm:$0xff]
        %v276 = vld [vmem:[%s223 + $0x188] sm:$0xff]
        %v277 = vld [vmem:[%s223 + $0x190] sm:$0xff]
        %v278 = vld [vmem:[%s223 + $0x198] sm:$0xff]
        %v279 = vld [vmem:[%s223 + $0x1a0] sm:$0xff]
        %v280 = vld [vmem:[%s223 + $0x1a8] sm:$0xff]
        %v281 = vld [vmem:[%s223 + $0x1b0] sm:$0xff]
        %v282 = vld [vmem:[%s223 + $0x1b8] sm:$0xff]
        %v283 = vld [vmem:[%s223 + $0x1c0] sm:$0xff]
        %v284 = vld [vmem:[%s223 + $0x1c8] sm:$0xff]
        %v285 = vld [vmem:[%s223 + $0x1d0] sm:$0xff]
        %v286 = vld [vmem:[%s223 + $0x1d8] sm:$0xff]
        %v287 = vld [vmem:[%s223 + $0x1e0] sm:$0xff]
        %v288 = vld [vmem:[%s223 + $0x1e8] sm:$0xff]
        %v289 = vld [vmem:[%s223 + $0x1f0] sm:$0xff]
        %v290 = vld [vmem:[%s223 + $0x1f8] sm:$0xff]
        %v291 = vld [vmem:[%s1] sm:$0x1f]
        %v292 = vld [vmem:[%s2] sm:$0x1]
        %294 = vset.pattern.permute.xlu0 0
        %295 = vperm.xlu0 %294, %v227
        %v296 = vpop.permute.xlu0 %295
        %299 = vset.pattern.permute.xlu0 0
        %300 = vperm.xlu0 %299, %v228
        %v301 = vpop.permute.xlu0 %300
        %304 = vset.pattern.permute.xlu0 0
        %305 = vperm.xlu0 %304, %v229
        %v306 = vpop.permute.xlu0 %305
        %309 = vset.pattern.permute.xlu0 0
        %310 = vperm.xlu0 %309, %v230
        %v311 = vpop.permute.xlu0 %310
        %314 = vset.pattern.permute.xlu0 0
        %315 = vperm.xlu0 %314, %v231
        %v316 = vpop.permute.xlu0 %315
        %319 = vset.pattern.permute.xlu0 0
        %320 = vperm.xlu0 %319, %v232
        %v321 = vpop.permute.xlu0 %320
        %324 = vset.pattern.permute.xlu0 0
        %325 = vperm.xlu0 %324, %v233
        %v326 = vpop.permute.xlu0 %325
        %329 = vset.pattern.permute.xlu0 0
        %330 = vperm.xlu0 %329, %v234
        %v331 = vpop.permute.xlu0 %330
        %334 = vset.pattern.permute.xlu0 0
        %335 = vperm.xlu0 %334, %v235
        %v336 = vpop.permute.xlu0 %335
        %339 = vset.pattern.permute.xlu0 0
        %340 = vperm.xlu0 %339, %v236
        %v341 = vpop.permute.xlu0 %340
        %344 = vset.pattern.permute.xlu0 0
        %345 = vperm.xlu0 %344, %v237
        %v346 = vpop.permute.xlu0 %345
        %349 = vset.pattern.permute.xlu0 0
        %350 = vperm.xlu0 %349, %v238
        %v351 = vpop.permute.xlu0 %350
        %354 = vset.pattern.permute.xlu0 0
        %355 = vperm.xlu0 %354, %v239
        %v356 = vpop.permute.xlu0 %355
        %359 = vset.pattern.permute.xlu0 0
        %360 = vperm.xlu0 %359, %v240
        %v361 = vpop.permute.xlu0 %360
        %364 = vset.pattern.permute.xlu0 0
        %365 = vperm.xlu0 %364, %v241
        %v366 = vpop.permute.xlu0 %365
        %369 = vset.pattern.permute.xlu0 0
        %370 = vperm.xlu0 %369, %v242
        %v371 = vpop.permute.xlu0 %370
        %374 = vset.pattern.permute.xlu0 0
        %375 = vperm.xlu0 %374, %v243
        %v376 = vpop.permute.xlu0 %375
        %379 = vset.pattern.permute.xlu0 0
        %380 = vperm.xlu0 %379, %v244
        %v381 = vpop.permute.xlu0 %380
        %384 = vset.pattern.permute.xlu0 0
        %385 = vperm.xlu0 %384, %v245
        %v386 = vpop.permute.xlu0 %385
        %389 = vset.pattern.permute.xlu0 0
        %390 = vperm.xlu0 %389, %v246
        %v391 = vpop.permute.xlu0 %390
        %394 = vset.pattern.permute.xlu0 0
        %395 = vperm.xlu0 %394, %v247
        %v396 = vpop.permute.xlu0 %395
        %399 = vset.pattern.permute.xlu0 0
        %400 = vperm.xlu0 %399, %v248
        %v401 = vpop.permute.xlu0 %400
        %404 = vset.pattern.permute.xlu0 0
        %405 = vperm.xlu0 %404, %v249
        %v406 = vpop.permute.xlu0 %405
        %409 = vset.pattern.permute.xlu0 0
        %410 = vperm.xlu0 %409, %v250
        %v411 = vpop.permute.xlu0 %410
        %414 = vset.pattern.permute.xlu0 0
        %415 = vperm.xlu0 %414, %v251
        %v416 = vpop.permute.xlu0 %415
        %419 = vset.pattern.permute.xlu0 0
        %420 = vperm.xlu0 %419, %v252
        %v421 = vpop.permute.xlu0 %420
        %424 = vset.pattern.permute.xlu0 0
        %425 = vperm.xlu0 %424, %v253
        %v426 = vpop.permute.xlu0 %425
        %429 = vset.pattern.permute.xlu0 0
        %430 = vperm.xlu0 %429, %v254
        %v431 = vpop.permute.xlu0 %430
        %434 = vset.pattern.permute.xlu0 0
        %435 = vperm.xlu0 %434, %v255
        %v436 = vpop.permute.xlu0 %435
        %439 = vset.pattern.permute.xlu0 0
        %440 = vperm.xlu0 %439, %v256
        %v441 = vpop.permute.xlu0 %440
        %444 = vset.pattern.permute.xlu0 0
        %445 = vperm.xlu0 %444, %v257
        %v446 = vpop.permute.xlu0 %445
        %449 = vset.pattern.permute.xlu0 0
        %450 = vperm.xlu0 %449, %v258
        %v451 = vpop.permute.xlu0 %450
        %454 = vset.pattern.permute.xlu0 0
        %455 = vperm.xlu0 %454, %v259
        %v456 = vpop.permute.xlu0 %455
        %459 = vset.pattern.permute.xlu0 0
        %460 = vperm.xlu0 %459, %v260
        %v461 = vpop.permute.xlu0 %460
        %464 = vset.pattern.permute.xlu0 0
        %465 = vperm.xlu0 %464, %v261
        %v466 = vpop.permute.xlu0 %465
        %469 = vset.pattern.permute.xlu0 0
        %470 = vperm.xlu0 %469, %v262
        %v471 = vpop.permute.xlu0 %470
        %474 = vset.pattern.permute.xlu0 0
        %475 = vperm.xlu0 %474, %v263
        %v476 = vpop.permute.xlu0 %475
        %479 = vset.pattern.permute.xlu0 0
        %480 = vperm.xlu0 %479, %v264
        %v481 = vpop.permute.xlu0 %480
        %484 = vset.pattern.permute.xlu0 0
        %485 = vperm.xlu0 %484, %v265
        %v486 = vpop.permute.xlu0 %485
        %489 = vset.pattern.permute.xlu0 0
        %490 = vperm.xlu0 %489, %v266
        %v491 = vpop.permute.xlu0 %490
        %494 = vset.pattern.permute.xlu0 0
        %495 = vperm.xlu0 %494, %v267
        %v496 = vpop.permute.xlu0 %495
        %499 = vset.pattern.permute.xlu0 0
        %500 = vperm.xlu0 %499, %v268
        %v501 = vpop.permute.xlu0 %500
        %504 = vset.pattern.permute.xlu0 0
        %505 = vperm.xlu0 %504, %v269
        %v506 = vpop.permute.xlu0 %505
        %509 = vset.pattern.permute.xlu0 0
        %510 = vperm.xlu0 %509, %v270
        %v511 = vpop.permute.xlu0 %510
        %514 = vset.pattern.permute.xlu0 0
        %515 = vperm.xlu0 %514, %v271
        %v516 = vpop.permute.xlu0 %515
        %519 = vset.pattern.permute.xlu0 0
        %520 = vperm.xlu0 %519, %v272
        %v521 = vpop.permute.xlu0 %520
        %524 = vset.pattern.permute.xlu0 0
        %525 = vperm.xlu0 %524, %v273
        %v526 = vpop.permute.xlu0 %525
        %529 = vset.pattern.permute.xlu0 0
        %530 = vperm.xlu0 %529, %v274
        %v531 = vpop.permute.xlu0 %530
        %534 = vset.pattern.permute.xlu0 0
        %535 = vperm.xlu0 %534, %v275
        %v536 = vpop.permute.xlu0 %535
        %539 = vset.pattern.permute.xlu0 0
        %540 = vperm.xlu0 %539, %v276
        %v541 = vpop.permute.xlu0 %540
        %544 = vset.pattern.permute.xlu0 0
        %545 = vperm.xlu0 %544, %v277
        %v546 = vpop.permute.xlu0 %545
        %549 = vset.pattern.permute.xlu0 0
        %550 = vperm.xlu0 %549, %v278
        %v551 = vpop.permute.xlu0 %550
        %554 = vset.pattern.permute.xlu0 0
        %555 = vperm.xlu0 %554, %v279
        %v556 = vpop.permute.xlu0 %555
        %559 = vset.pattern.permute.xlu0 0
        %560 = vperm.xlu0 %559, %v280
        %v561 = vpop.permute.xlu0 %560
        %564 = vset.pattern.permute.xlu0 0
        %565 = vperm.xlu0 %564, %v281
        %v566 = vpop.permute.xlu0 %565
        %569 = vset.pattern.permute.xlu0 0
        %570 = vperm.xlu0 %569, %v282
        %v571 = vpop.permute.xlu0 %570
        %574 = vset.pattern.permute.xlu0 0
        %575 = vperm.xlu0 %574, %v283
        %v576 = vpop.permute.xlu0 %575
        %579 = vset.pattern.permute.xlu0 0
        %580 = vperm.xlu0 %579, %v284
        %v581 = vpop.permute.xlu0 %580
        %584 = vset.pattern.permute.xlu0 0
        %585 = vperm.xlu0 %584, %v285
        %v586 = vpop.permute.xlu0 %585
        %589 = vset.pattern.permute.xlu0 0
        %590 = vperm.xlu0 %589, %v286
        %v591 = vpop.permute.xlu0 %590
        %594 = vset.pattern.permute.xlu0 0
        %595 = vperm.xlu0 %594, %v287
        %v596 = vpop.permute.xlu0 %595
        %599 = vset.pattern.permute.xlu0 0
        %600 = vperm.xlu0 %599, %v288
        %v601 = vpop.permute.xlu0 %600
        %604 = vset.pattern.permute.xlu0 0
        %605 = vperm.xlu0 %604, %v289
        %v606 = vpop.permute.xlu0 %605
        %609 = vset.pattern.permute.xlu0 0
        %610 = vperm.xlu0 %609, %v290
        %v611 = vpop.permute.xlu0 %610
        %v613 = vlaneseq
        %v614 = vshrl.u32 %v613, 7
        %v615 = vsub.s32 0, %v614
        %v616 = vrot.slane %v291, %v615
        %v617 = vmul.f32 %v296, %v616
        %v618 = vmul.f32 %v301, %v616
        %v619 = vmul.f32 %v306, %v616
        %v620 = vmul.f32 %v311, %v616
        %v621 = vmul.f32 %v316, %v616
        %v622 = vmul.f32 %v321, %v616
        %v623 = vmul.f32 %v326, %v616
        %v624 = vmul.f32 %v331, %v616
        %v625 = vmul.f32 %v336, %v616
        %v626 = vmul.f32 %v341, %v616
        %v627 = vmul.f32 %v346, %v616
        %v628 = vmul.f32 %v351, %v616
        %v629 = vmul.f32 %v356, %v616
        %v630 = vmul.f32 %v361, %v616
        %v631 = vmul.f32 %v366, %v616
        %v632 = vmul.f32 %v371, %v616
        %v633 = vmul.f32 %v376, %v616
        %v634 = vmul.f32 %v381, %v616
        %v635 = vmul.f32 %v386, %v616
        %v636 = vmul.f32 %v391, %v616
        %v637 = vmul.f32 %v396, %v616
        %v638 = vmul.f32 %v401, %v616
        %v639 = vmul.f32 %v406, %v616
        %v640 = vmul.f32 %v411, %v616
        %v641 = vmul.f32 %v416, %v616
        %v642 = vmul.f32 %v421, %v616
        %v643 = vmul.f32 %v426, %v616
        %v644 = vmul.f32 %v431, %v616
        %v645 = vmul.f32 %v436, %v616
        %v646 = vmul.f32 %v441, %v616
        %v647 = vmul.f32 %v446, %v616
        %v648 = vmul.f32 %v451, %v616
        %v649 = vmul.f32 %v456, %v616
        %v650 = vmul.f32 %v461, %v616
        %v651 = vmul.f32 %v466, %v616
        %v652 = vmul.f32 %v471, %v616
        %v653 = vmul.f32 %v476, %v616
        %v654 = vmul.f32 %v481, %v616
        %v655 = vmul.f32 %v486, %v616
        %v656 = vmul.f32 %v491, %v616
        %v657 = vmul.f32 %v496, %v616
        %v658 = vmul.f32 %v501, %v616
        %v659 = vmul.f32 %v506, %v616
        %v660 = vmul.f32 %v511, %v616
        %v661 = vmul.f32 %v516, %v616
        %v662 = vmul.f32 %v521, %v616
        %v663 = vmul.f32 %v526, %v616
        %v664 = vmul.f32 %v531, %v616
        %v665 = vmul.f32 %v536, %v616
        %v666 = vmul.f32 %v541, %v616
        %v667 = vmul.f32 %v546, %v616
        %v668 = vmul.f32 %v551, %v616
        %v669 = vmul.f32 %v556, %v616
        %v670 = vmul.f32 %v561, %v616
        %v671 = vmul.f32 %v566, %v616
        %v672 = vmul.f32 %v571, %v616
        %v673 = vmul.f32 %v576, %v616
        %v674 = vmul.f32 %v581, %v616
        %v675 = vmul.f32 %v586, %v616
        %v676 = vmul.f32 %v591, %v616
        %v677 = vmul.f32 %v596, %v616
        %v678 = vmul.f32 %v601, %v616
        %v679 = vmul.f32 %v606, %v616
        %v680 = vmul.f32 %v611, %v616
        %v682 = vlaneseq
        %v683 = vshrl.u32 %v682, 7
        %v684 = vsub.s32 0, %v683
        %v685 = vrot.slane %v292, %v684
        %v687 = vadd.f32 %v685, %v617
        %v688 = vadd.f32 %v685, %v618
        %v689 = vadd.f32 %v685, %v619
        %v690 = vadd.f32 %v685, %v620
        %v691 = vadd.f32 %v685, %v621
        %v692 = vadd.f32 %v685, %v622
        %v693 = vadd.f32 %v685, %v623
        %v694 = vadd.f32 %v685, %v624
        %v695 = vadd.f32 %v685, %v625
        %v696 = vadd.f32 %v685, %v626
        %v697 = vadd.f32 %v685, %v627
        %v698 = vadd.f32 %v685, %v628
        %v699 = vadd.f32 %v685, %v629
        %v700 = vadd.f32 %v685, %v630
        %v701 = vadd.f32 %v685, %v631
        %v702 = vadd.f32 %v685, %v632
        %v703 = vadd.f32 %v685, %v633
        %v704 = vadd.f32 %v685, %v634
        %v705 = vadd.f32 %v685, %v635
        %v706 = vadd.f32 %v685, %v636
        %v707 = vadd.f32 %v685, %v637
        %v708 = vadd.f32 %v685, %v638
        %v709 = vadd.f32 %v685, %v639
        %v710 = vadd.f32 %v685, %v640
        %v711 = vadd.f32 %v685, %v641
        %v712 = vadd.f32 %v685, %v642
        %v713 = vadd.f32 %v685, %v643
        %v714 = vadd.f32 %v685, %v644
        %v715 = vadd.f32 %v685, %v645
        %v716 = vadd.f32 %v685, %v646
        %v717 = vadd.f32 %v685, %v647
        %v718 = vadd.f32 %v685, %v648
        %v719 = vadd.f32 %v685, %v649
        %v720 = vadd.f32 %v685, %v650
        %v721 = vadd.f32 %v685, %v651
        %v722 = vadd.f32 %v685, %v652
        %v723 = vadd.f32 %v685, %v653
        %v724 = vadd.f32 %v685, %v654
        %v725 = vadd.f32 %v685, %v655
        %v726 = vadd.f32 %v685, %v656
        %v727 = vadd.f32 %v685, %v657
        %v728 = vadd.f32 %v685, %v658
        %v729 = vadd.f32 %v685, %v659
        %v730 = vadd.f32 %v685, %v660
        %v731 = vadd.f32 %v685, %v661
        %v732 = vadd.f32 %v685, %v662
        %v733 = vadd.f32 %v685, %v663
        %v734 = vadd.f32 %v685, %v664
        %v735 = vadd.f32 %v685, %v665
        %v736 = vadd.f32 %v685, %v666
        %v737 = vadd.f32 %v685, %v667
        %v738 = vadd.f32 %v685, %v668
        %v739 = vadd.f32 %v685, %v669
        %v740 = vadd.f32 %v685, %v670
        %v741 = vadd.f32 %v685, %v671
        %v742 = vadd.f32 %v685, %v672
        %v743 = vadd.f32 %v685, %v673
        %v744 = vadd.f32 %v685, %v674
        %v745 = vadd.f32 %v685, %v675
        %v746 = vadd.f32 %v685, %v676
        %v747 = vadd.f32 %v685, %v677
        %v748 = vadd.f32 %v685, %v678
        %v749 = vadd.f32 %v685, %v679
        %v750 = vadd.f32 %v685, %v680
        %751 = vset.pattern.permute.xlu0 1
        %752 = vperm.xlu0 %751, %v227
        %v753 = vpop.permute.xlu0 %752
        %755 = vset.pattern.permute.xlu0 1
        %756 = vperm.xlu0 %755, %v228
        %v757 = vpop.permute.xlu0 %756
        %759 = vset.pattern.permute.xlu0 1
        %760 = vperm.xlu0 %759, %v229
        %v761 = vpop.permute.xlu0 %760
        %763 = vset.pattern.permute.xlu0 1
        %764 = vperm.xlu0 %763, %v230
        %v765 = vpop.permute.xlu0 %764
        %767 = vset.pattern.permute.xlu0 1
        %768 = vperm.xlu0 %767, %v231
        %v769 = vpop.permute.xlu0 %768
        %771 = vset.pattern.permute.xlu0 1
        %772 = vperm.xlu0 %771, %v232
        %v773 = vpop.permute.xlu0 %772
        %775 = vset.pattern.permute.xlu0 1
        %776 = vperm.xlu0 %775, %v233
        %v777 = vpop.permute.xlu0 %776
        %779 = vset.pattern.permute.xlu0 1
        %780 = vperm.xlu0 %779, %v234
        %v781 = vpop.permute.xlu0 %780
        %783 = vset.pattern.permute.xlu0 1
        %784 = vperm.xlu0 %783, %v235
        %v785 = vpop.permute.xlu0 %784
        %787 = vset.pattern.permute.xlu0 1
        %788 = vperm.xlu0 %787, %v236
        %v789 = vpop.permute.xlu0 %788
        %791 = vset.pattern.permute.xlu0 1
        %792 = vperm.xlu0 %791, %v237
        %v793 = vpop.permute.xlu0 %792
        %795 = vset.pattern.permute.xlu0 1
        %796 = vperm.xlu0 %795, %v238
        %v797 = vpop.permute.xlu0 %796
        %799 = vset.pattern.permute.xlu0 1
        %800 = vperm.xlu0 %799, %v239
        %v801 = vpop.permute.xlu0 %800
        %803 = vset.pattern.permute.xlu0 1
        %804 = vperm.xlu0 %803, %v240
        %v805 = vpop.permute.xlu0 %804
        %807 = vset.pattern.permute.xlu0 1
        %808 = vperm.xlu0 %807, %v241
        %v809 = vpop.permute.xlu0 %808
        %811 = vset.pattern.permute.xlu0 1
        %812 = vperm.xlu0 %811, %v242
        %v813 = vpop.permute.xlu0 %812
        %815 = vset.pattern.permute.xlu0 1
        %816 = vperm.xlu0 %815, %v243
        %v817 = vpop.permute.xlu0 %816
        %819 = vset.pattern.permute.xlu0 1
        %820 = vperm.xlu0 %819, %v244
        %v821 = vpop.permute.xlu0 %820
        %823 = vset.pattern.permute.xlu0 1
        %824 = vperm.xlu0 %823, %v245
        %v825 = vpop.permute.xlu0 %824
        %827 = vset.pattern.permute.xlu0 1
        %828 = vperm.xlu0 %827, %v246
        %v829 = vpop.permute.xlu0 %828
        %831 = vset.pattern.permute.xlu0 1
        %832 = vperm.xlu0 %831, %v247
        %v833 = vpop.permute.xlu0 %832
        %835 = vset.pattern.permute.xlu0 1
        %836 = vperm.xlu0 %835, %v248
        %v837 = vpop.permute.xlu0 %836
        %839 = vset.pattern.permute.xlu0 1
        %840 = vperm.xlu0 %839, %v249
        %v841 = vpop.permute.xlu0 %840
        %843 = vset.pattern.permute.xlu0 1
        %844 = vperm.xlu0 %843, %v250
        %v845 = vpop.permute.xlu0 %844
        %847 = vset.pattern.permute.xlu0 1
        %848 = vperm.xlu0 %847, %v251
        %v849 = vpop.permute.xlu0 %848
        %851 = vset.pattern.permute.xlu0 1
        %852 = vperm.xlu0 %851, %v252
        %v853 = vpop.permute.xlu0 %852
        %855 = vset.pattern.permute.xlu0 1
        %856 = vperm.xlu0 %855, %v253
        %v857 = vpop.permute.xlu0 %856
        %859 = vset.pattern.permute.xlu0 1
        %860 = vperm.xlu0 %859, %v254
        %v861 = vpop.permute.xlu0 %860
        %863 = vset.pattern.permute.xlu0 1
        %864 = vperm.xlu0 %863, %v255
        %v865 = vpop.permute.xlu0 %864
        %867 = vset.pattern.permute.xlu0 1
        %868 = vperm.xlu0 %867, %v256
        %v869 = vpop.permute.xlu0 %868
        %871 = vset.pattern.permute.xlu0 1
        %872 = vperm.xlu0 %871, %v257
        %v873 = vpop.permute.xlu0 %872
        %875 = vset.pattern.permute.xlu0 1
        %876 = vperm.xlu0 %875, %v258
        %v877 = vpop.permute.xlu0 %876
        %879 = vset.pattern.permute.xlu0 1
        %880 = vperm.xlu0 %879, %v259
        %v881 = vpop.permute.xlu0 %880
        %883 = vset.pattern.permute.xlu0 1
        %884 = vperm.xlu0 %883, %v260
        %v885 = vpop.permute.xlu0 %884
        %887 = vset.pattern.permute.xlu0 1
        %888 = vperm.xlu0 %887, %v261
        %v889 = vpop.permute.xlu0 %888
        %891 = vset.pattern.permute.xlu0 1
        %892 = vperm.xlu0 %891, %v262
        %v893 = vpop.permute.xlu0 %892
        %895 = vset.pattern.permute.xlu0 1
        %896 = vperm.xlu0 %895, %v263
        %v897 = vpop.permute.xlu0 %896
        %899 = vset.pattern.permute.xlu0 1
        %900 = vperm.xlu0 %899, %v264
        %v901 = vpop.permute.xlu0 %900
        %903 = vset.pattern.permute.xlu0 1
        %904 = vperm.xlu0 %903, %v265
        %v905 = vpop.permute.xlu0 %904
        %907 = vset.pattern.permute.xlu0 1
        %908 = vperm.xlu0 %907, %v266
        %v909 = vpop.permute.xlu0 %908
        %911 = vset.pattern.permute.xlu0 1
        %912 = vperm.xlu0 %911, %v267
        %v913 = vpop.permute.xlu0 %912
        %915 = vset.pattern.permute.xlu0 1
        %916 = vperm.xlu0 %915, %v268
        %v917 = vpop.permute.xlu0 %916
        %919 = vset.pattern.permute.xlu0 1
        %920 = vperm.xlu0 %919, %v269
        %v921 = vpop.permute.xlu0 %920
        %923 = vset.pattern.permute.xlu0 1
        %924 = vperm.xlu0 %923, %v270
        %v925 = vpop.permute.xlu0 %924
        %927 = vset.pattern.permute.xlu0 1
        %928 = vperm.xlu0 %927, %v271
        %v929 = vpop.permute.xlu0 %928
        %931 = vset.pattern.permute.xlu0 1
        %932 = vperm.xlu0 %931, %v272
        %v933 = vpop.permute.xlu0 %932
        %935 = vset.pattern.permute.xlu0 1
        %936 = vperm.xlu0 %935, %v273
        %v937 = vpop.permute.xlu0 %936
        %939 = vset.pattern.permute.xlu0 1
        %940 = vperm.xlu0 %939, %v274
        %v941 = vpop.permute.xlu0 %940
        %943 = vset.pattern.permute.xlu0 1
        %944 = vperm.xlu0 %943, %v275
        %v945 = vpop.permute.xlu0 %944
        %947 = vset.pattern.permute.xlu0 1
        %948 = vperm.xlu0 %947, %v276
        %v949 = vpop.permute.xlu0 %948
        %951 = vset.pattern.permute.xlu0 1
        %952 = vperm.xlu0 %951, %v277
        %v953 = vpop.permute.xlu0 %952
        %955 = vset.pattern.permute.xlu0 1
        %956 = vperm.xlu0 %955, %v278
        %v957 = vpop.permute.xlu0 %956
        %959 = vset.pattern.permute.xlu0 1
        %960 = vperm.xlu0 %959, %v279
        %v961 = vpop.permute.xlu0 %960
        %963 = vset.pattern.permute.xlu0 1
        %964 = vperm.xlu0 %963, %v280
        %v965 = vpop.permute.xlu0 %964
        %967 = vset.pattern.permute.xlu0 1
        %968 = vperm.xlu0 %967, %v281
        %v969 = vpop.permute.xlu0 %968
        %971 = vset.pattern.permute.xlu0 1
        %972 = vperm.xlu0 %971, %v282
        %v973 = vpop.permute.xlu0 %972
        %975 = vset.pattern.permute.xlu0 1
        %976 = vperm.xlu0 %975, %v283
        %v977 = vpop.permute.xlu0 %976
        %979 = vset.pattern.permute.xlu0 1
        %980 = vperm.xlu0 %979, %v284
        %v981 = vpop.permute.xlu0 %980
        %983 = vset.pattern.permute.xlu0 1
        %984 = vperm.xlu0 %983, %v285
        %v985 = vpop.permute.xlu0 %984
        %987 = vset.pattern.permute.xlu0 1
        %988 = vperm.xlu0 %987, %v286
        %v989 = vpop.permute.xlu0 %988
        %991 = vset.pattern.permute.xlu0 1
        %992 = vperm.xlu0 %991, %v287
        %v993 = vpop.permute.xlu0 %992
        %995 = vset.pattern.permute.xlu0 1
        %996 = vperm.xlu0 %995, %v288
        %v997 = vpop.permute.xlu0 %996
        %999 = vset.pattern.permute.xlu0 1
        %1000 = vperm.xlu0 %999, %v289
        %v1001 = vpop.permute.xlu0 %1000
        %1003 = vset.pattern.permute.xlu0 1
        %1004 = vperm.xlu0 %1003, %v290
        %v1005 = vpop.permute.xlu0 %1004
        %v1007 = vlaneseq
        %v1008 = vshrl.u32 %v1007, 7
        %v1009 = vsub.s32 1, %v1008
        %v1010 = vrot.slane %v291, %v1009
        %v1011 = vmul.f32 %v753, %v1010
        %v1012 = vmul.f32 %v757, %v1010
        %v1013 = vmul.f32 %v761, %v1010
        %v1014 = vmul.f32 %v765, %v1010
        %v1015 = vmul.f32 %v769, %v1010
        %v1016 = vmul.f32 %v773, %v1010
        %v1017 = vmul.f32 %v777, %v1010
        %v1018 = vmul.f32 %v781, %v1010
        %v1019 = vmul.f32 %v785, %v1010
        %v1020 = vmul.f32 %v789, %v1010
        %v1021 = vmul.f32 %v793, %v1010
        %v1022 = vmul.f32 %v797, %v1010
        %v1023 = vmul.f32 %v801, %v1010
        %v1024 = vmul.f32 %v805, %v1010
        %v1025 = vmul.f32 %v809, %v1010
        %v1026 = vmul.f32 %v813, %v1010
        %v1027 = vmul.f32 %v817, %v1010
        %v1028 = vmul.f32 %v821, %v1010
        %v1029 = vmul.f32 %v825, %v1010
        %v1030 = vmul.f32 %v829, %v1010
        %v1031 = vmul.f32 %v833, %v1010
        %v1032 = vmul.f32 %v837, %v1010
        %v1033 = vmul.f32 %v841, %v1010
        %v1034 = vmul.f32 %v845, %v1010
        %v1035 = vmul.f32 %v849, %v1010
        %v1036 = vmul.f32 %v853, %v1010
        %v1037 = vmul.f32 %v857, %v1010
        %v1038 = vmul.f32 %v861, %v1010
        %v1039 = vmul.f32 %v865, %v1010
        %v1040 = vmul.f32 %v869, %v1010
        %v1041 = vmul.f32 %v873, %v1010
        %v1042 = vmul.f32 %v877, %v1010
        %v1043 = vmul.f32 %v881, %v1010
        %v1044 = vmul.f32 %v885, %v1010
        %v1045 = vmul.f32 %v889, %v1010
        %v1046 = vmul.f32 %v893, %v1010
        %v1047 = vmul.f32 %v897, %v1010
        %v1048 = vmul.f32 %v901, %v1010
        %v1049 = vmul.f32 %v905, %v1010
        %v1050 = vmul.f32 %v909, %v1010
        %v1051 = vmul.f32 %v913, %v1010
        %v1052 = vmul.f32 %v917, %v1010
        %v1053 = vmul.f32 %v921, %v1010
        %v1054 = vmul.f32 %v925, %v1010
        %v1055 = vmul.f32 %v929, %v1010
        %v1056 = vmul.f32 %v933, %v1010
        %v1057 = vmul.f32 %v937, %v1010
        %v1058 = vmul.f32 %v941, %v1010
        %v1059 = vmul.f32 %v945, %v1010
        %v1060 = vmul.f32 %v949, %v1010
        %v1061 = vmul.f32 %v953, %v1010
        %v1062 = vmul.f32 %v957, %v1010
        %v1063 = vmul.f32 %v961, %v1010
        %v1064 = vmul.f32 %v965, %v1010
        %v1065 = vmul.f32 %v969, %v1010
        %v1066 = vmul.f32 %v973, %v1010
        %v1067 = vmul.f32 %v977, %v1010
        %v1068 = vmul.f32 %v981, %v1010
        %v1069 = vmul.f32 %v985, %v1010
        %v1070 = vmul.f32 %v989, %v1010
        %v1071 = vmul.f32 %v993, %v1010
        %v1072 = vmul.f32 %v997, %v1010
        %v1073 = vmul.f32 %v1001, %v1010
        %v1074 = vmul.f32 %v1005, %v1010
        %v1075 = vadd.f32 %v687, %v1011
        %v1076 = vadd.f32 %v688, %v1012
        %v1077 = vadd.f32 %v689, %v1013
        %v1078 = vadd.f32 %v690, %v1014
        %v1079 = vadd.f32 %v691, %v1015
        %v1080 = vadd.f32 %v692, %v1016
        %v1081 = vadd.f32 %v693, %v1017
        %v1082 = vadd.f32 %v694, %v1018
        %v1083 = vadd.f32 %v695, %v1019
        %v1084 = vadd.f32 %v696, %v1020
        %v1085 = vadd.f32 %v697, %v1021
        %v1086 = vadd.f32 %v698, %v1022
        %v1087 = vadd.f32 %v699, %v1023
        %v1088 = vadd.f32 %v700, %v1024
        %v1089 = vadd.f32 %v701, %v1025
        %v1090 = vadd.f32 %v702, %v1026
        %v1091 = vadd.f32 %v703, %v1027
        %v1092 = vadd.f32 %v704, %v1028
        %v1093 = vadd.f32 %v705, %v1029
        %v1094 = vadd.f32 %v706, %v1030
        %v1095 = vadd.f32 %v707, %v1031
        %v1096 = vadd.f32 %v708, %v1032
        %v1097 = vadd.f32 %v709, %v1033
        %v1098 = vadd.f32 %v710, %v1034
        %v1099 = vadd.f32 %v711, %v1035
        %v1100 = vadd.f32 %v712, %v1036
        %v1101 = vadd.f32 %v713, %v1037
        %v1102 = vadd.f32 %v714, %v1038
        %v1103 = vadd.f32 %v715, %v1039
        %v1104 = vadd.f32 %v716, %v1040
        %v1105 = vadd.f32 %v717, %v1041
        %v1106 = vadd.f32 %v718, %v1042
        %v1107 = vadd.f32 %v719, %v1043
        %v1108 = vadd.f32 %v720, %v1044
        %v1109 = vadd.f32 %v721, %v1045
        %v1110 = vadd.f32 %v722, %v1046
        %v1111 = vadd.f32 %v723, %v1047
        %v1112 = vadd.f32 %v724, %v1048
        %v1113 = vadd.f32 %v725, %v1049
        %v1114 = vadd.f32 %v726, %v1050
        %v1115 = vadd.f32 %v727, %v1051
        %v1116 = vadd.f32 %v728, %v1052
        %v1117 = vadd.f32 %v729, %v1053
        %v1118 = vadd.f32 %v730, %v1054
        %v1119 = vadd.f32 %v731, %v1055
        %v1120 = vadd.f32 %v732, %v1056
        %v1121 = vadd.f32 %v733, %v1057
        %v1122 = vadd.f32 %v734, %v1058
        %v1123 = vadd.f32 %v735, %v1059
        %v1124 = vadd.f32 %v736, %v1060
        %v1125 = vadd.f32 %v737, %v1061
        %v1126 = vadd.f32 %v738, %v1062
        %v1127 = vadd.f32 %v739, %v1063
        %v1128 = vadd.f32 %v740, %v1064
        %v1129 = vadd.f32 %v741, %v1065
        %v1130 = vadd.f32 %v742, %v1066
        %v1131 = vadd.f32 %v743, %v1067
        %v1132 = vadd.f32 %v744, %v1068
        %v1133 = vadd.f32 %v745, %v1069
        %v1134 = vadd.f32 %v746, %v1070
        %v1135 = vadd.f32 %v747, %v1071
        %v1136 = vadd.f32 %v748, %v1072
        %v1137 = vadd.f32 %v749, %v1073
        %v1138 = vadd.f32 %v750, %v1074
        %1139 = vset.pattern.permute.xlu0 2
        %1140 = vperm.xlu0 %1139, %v227
        %v1141 = vpop.permute.xlu0 %1140
        %1143 = vset.pattern.permute.xlu0 2
        %1144 = vperm.xlu0 %1143, %v228
        %v1145 = vpop.permute.xlu0 %1144
        %1147 = vset.pattern.permute.xlu0 2
        %1148 = vperm.xlu0 %1147, %v229
        %v1149 = vpop.permute.xlu0 %1148
        %1151 = vset.pattern.permute.xlu0 2
        %1152 = vperm.xlu0 %1151, %v230
        %v1153 = vpop.permute.xlu0 %1152
        %1155 = vset.pattern.permute.xlu0 2
        %1156 = vperm.xlu0 %1155, %v231
        %v1157 = vpop.permute.xlu0 %1156
        %1159 = vset.pattern.permute.xlu0 2
        %1160 = vperm.xlu0 %1159, %v232
        %v1161 = vpop.permute.xlu0 %1160
        %1163 = vset.pattern.permute.xlu0 2
        %1164 = vperm.xlu0 %1163, %v233
        %v1165 = vpop.permute.xlu0 %1164
        %1167 = vset.pattern.permute.xlu0 2
        %1168 = vperm.xlu0 %1167, %v234
        %v1169 = vpop.permute.xlu0 %1168
        %1171 = vset.pattern.permute.xlu0 2
        %1172 = vperm.xlu0 %1171, %v235
        %v1173 = vpop.permute.xlu0 %1172
        %1175 = vset.pattern.permute.xlu0 2
        %1176 = vperm.xlu0 %1175, %v236
        %v1177 = vpop.permute.xlu0 %1176
        %1179 = vset.pattern.permute.xlu0 2
        %1180 = vperm.xlu0 %1179, %v237
        %v1181 = vpop.permute.xlu0 %1180
        %1183 = vset.pattern.permute.xlu0 2
        %1184 = vperm.xlu0 %1183, %v238
        %v1185 = vpop.permute.xlu0 %1184
        %1187 = vset.pattern.permute.xlu0 2
        %1188 = vperm.xlu0 %1187, %v239
        %v1189 = vpop.permute.xlu0 %1188
        %1191 = vset.pattern.permute.xlu0 2
        %1192 = vperm.xlu0 %1191, %v240
        %v1193 = vpop.permute.xlu0 %1192
        %1195 = vset.pattern.permute.xlu0 2
        %1196 = vperm.xlu0 %1195, %v241
        %v1197 = vpop.permute.xlu0 %1196
        %1199 = vset.pattern.permute.xlu0 2
        %1200 = vperm.xlu0 %1199, %v242
        %v1201 = vpop.permute.xlu0 %1200
        %1203 = vset.pattern.permute.xlu0 2
        %1204 = vperm.xlu0 %1203, %v243
        %v1205 = vpop.permute.xlu0 %1204
        %1207 = vset.pattern.permute.xlu0 2
        %1208 = vperm.xlu0 %1207, %v244
        %v1209 = vpop.permute.xlu0 %1208
        %1211 = vset.pattern.permute.xlu0 2
        %1212 = vperm.xlu0 %1211, %v245
        %v1213 = vpop.permute.xlu0 %1212
        %1215 = vset.pattern.permute.xlu0 2
        %1216 = vperm.xlu0 %1215, %v246
        %v1217 = vpop.permute.xlu0 %1216
        %1219 = vset.pattern.permute.xlu0 2
        %1220 = vperm.xlu0 %1219, %v247
        %v1221 = vpop.permute.xlu0 %1220
        %1223 = vset.pattern.permute.xlu0 2
        %1224 = vperm.xlu0 %1223, %v248
        %v1225 = vpop.permute.xlu0 %1224
        %1227 = vset.pattern.permute.xlu0 2
        %1228 = vperm.xlu0 %1227, %v249
        %v1229 = vpop.permute.xlu0 %1228
        %1231 = vset.pattern.permute.xlu0 2
        %1232 = vperm.xlu0 %1231, %v250
        %v1233 = vpop.permute.xlu0 %1232
        %1235 = vset.pattern.permute.xlu0 2
        %1236 = vperm.xlu0 %1235, %v251
        %v1237 = vpop.permute.xlu0 %1236
        %1239 = vset.pattern.permute.xlu0 2
        %1240 = vperm.xlu0 %1239, %v252
        %v1241 = vpop.permute.xlu0 %1240
        %1243 = vset.pattern.permute.xlu0 2
        %1244 = vperm.xlu0 %1243, %v253
        %v1245 = vpop.permute.xlu0 %1244
        %1247 = vset.pattern.permute.xlu0 2
        %1248 = vperm.xlu0 %1247, %v254
        %v1249 = vpop.permute.xlu0 %1248
        %1251 = vset.pattern.permute.xlu0 2
        %1252 = vperm.xlu0 %1251, %v255
        %v1253 = vpop.permute.xlu0 %1252
        %1255 = vset.pattern.permute.xlu0 2
        %1256 = vperm.xlu0 %1255, %v256
        %v1257 = vpop.permute.xlu0 %1256
        %1259 = vset.pattern.permute.xlu0 2
        %1260 = vperm.xlu0 %1259, %v257
        %v1261 = vpop.permute.xlu0 %1260
        %1263 = vset.pattern.permute.xlu0 2
        %1264 = vperm.xlu0 %1263, %v258
        %v1265 = vpop.permute.xlu0 %1264
        %1267 = vset.pattern.permute.xlu0 2
        %1268 = vperm.xlu0 %1267, %v259
        %v1269 = vpop.permute.xlu0 %1268
        %1271 = vset.pattern.permute.xlu0 2
        %1272 = vperm.xlu0 %1271, %v260
        %v1273 = vpop.permute.xlu0 %1272
        %1275 = vset.pattern.permute.xlu0 2
        %1276 = vperm.xlu0 %1275, %v261
        %v1277 = vpop.permute.xlu0 %1276
        %1279 = vset.pattern.permute.xlu0 2
        %1280 = vperm.xlu0 %1279, %v262
        %v1281 = vpop.permute.xlu0 %1280
        %1283 = vset.pattern.permute.xlu0 2
        %1284 = vperm.xlu0 %1283, %v263
        %v1285 = vpop.permute.xlu0 %1284
        %1287 = vset.pattern.permute.xlu0 2
        %1288 = vperm.xlu0 %1287, %v264
        %v1289 = vpop.permute.xlu0 %1288
        %1291 = vset.pattern.permute.xlu0 2
        %1292 = vperm.xlu0 %1291, %v265
        %v1293 = vpop.permute.xlu0 %1292
        %1295 = vset.pattern.permute.xlu0 2
        %1296 = vperm.xlu0 %1295, %v266
        %v1297 = vpop.permute.xlu0 %1296
        %1299 = vset.pattern.permute.xlu0 2
        %1300 = vperm.xlu0 %1299, %v267
        %v1301 = vpop.permute.xlu0 %1300
        %1303 = vset.pattern.permute.xlu0 2
        %1304 = vperm.xlu0 %1303, %v268
        %v1305 = vpop.permute.xlu0 %1304
        %1307 = vset.pattern.permute.xlu0 2
        %1308 = vperm.xlu0 %1307, %v269
        %v1309 = vpop.permute.xlu0 %1308
        %1311 = vset.pattern.permute.xlu0 2
        %1312 = vperm.xlu0 %1311, %v270
        %v1313 = vpop.permute.xlu0 %1312
        %1315 = vset.pattern.permute.xlu0 2
        %1316 = vperm.xlu0 %1315, %v271
        %v1317 = vpop.permute.xlu0 %1316
        %1319 = vset.pattern.permute.xlu0 2
        %1320 = vperm.xlu0 %1319, %v272
        %v1321 = vpop.permute.xlu0 %1320
        %1323 = vset.pattern.permute.xlu0 2
        %1324 = vperm.xlu0 %1323, %v273
        %v1325 = vpop.permute.xlu0 %1324
        %1327 = vset.pattern.permute.xlu0 2
        %1328 = vperm.xlu0 %1327, %v274
        %v1329 = vpop.permute.xlu0 %1328
        %1331 = vset.pattern.permute.xlu0 2
        %1332 = vperm.xlu0 %1331, %v275
        %v1333 = vpop.permute.xlu0 %1332
        %1335 = vset.pattern.permute.xlu0 2
        %1336 = vperm.xlu0 %1335, %v276
        %v1337 = vpop.permute.xlu0 %1336
        %1339 = vset.pattern.permute.xlu0 2
        %1340 = vperm.xlu0 %1339, %v277
        %v1341 = vpop.permute.xlu0 %1340
        %1343 = vset.pattern.permute.xlu0 2
        %1344 = vperm.xlu0 %1343, %v278
        %v1345 = vpop.permute.xlu0 %1344
        %1347 = vset.pattern.permute.xlu0 2
        %1348 = vperm.xlu0 %1347, %v279
        %v1349 = vpop.permute.xlu0 %1348
        %1351 = vset.pattern.permute.xlu0 2
        %1352 = vperm.xlu0 %1351, %v280
        %v1353 = vpop.permute.xlu0 %1352
        %1355 = vset.pattern.permute.xlu0 2
        %1356 = vperm.xlu0 %1355, %v281
        %v1357 = vpop.permute.xlu0 %1356
        %1359 = vset.pattern.permute.xlu0 2
        %1360 = vperm.xlu0 %1359, %v282
        %v1361 = vpop.permute.xlu0 %1360
        %1363 = vset.pattern.permute.xlu0 2
        %1364 = vperm.xlu0 %1363, %v283
        %v1365 = vpop.permute.xlu0 %1364
        %1367 = vset.pattern.permute.xlu0 2
        %1368 = vperm.xlu0 %1367, %v284
        %v1369 = vpop.permute.xlu0 %1368
        %1371 = vset.pattern.permute.xlu0 2
        %1372 = vperm.xlu0 %1371, %v285
        %v1373 = vpop.permute.xlu0 %1372
        %1375 = vset.pattern.permute.xlu0 2
        %1376 = vperm.xlu0 %1375, %v286
        %v1377 = vpop.permute.xlu0 %1376
        %1379 = vset.pattern.permute.xlu0 2
        %1380 = vperm.xlu0 %1379, %v287
        %v1381 = vpop.permute.xlu0 %1380
        %1383 = vset.pattern.permute.xlu0 2
        %1384 = vperm.xlu0 %1383, %v288
        %v1385 = vpop.permute.xlu0 %1384
        %1387 = vset.pattern.permute.xlu0 2
        %1388 = vperm.xlu0 %1387, %v289
        %v1389 = vpop.permute.xlu0 %1388
        %1391 = vset.pattern.permute.xlu0 2
        %1392 = vperm.xlu0 %1391, %v290
        %v1393 = vpop.permute.xlu0 %1392
        %v1395 = vlaneseq
        %v1396 = vshrl.u32 %v1395, 7
        %v1397 = vsub.s32 2, %v1396
        %v1398 = vrot.slane %v291, %v1397
        %v1399 = vmul.f32 %v1141, %v1398
        %v1400 = vmul.f32 %v1145, %v1398
        %v1401 = vmul.f32 %v1149, %v1398
        %v1402 = vmul.f32 %v1153, %v1398
        %v1403 = vmul.f32 %v1157, %v1398
        %v1404 = vmul.f32 %v1161, %v1398
        %v1405 = vmul.f32 %v1165, %v1398
        %v1406 = vmul.f32 %v1169, %v1398
        %v1407 = vmul.f32 %v1173, %v1398
        %v1408 = vmul.f32 %v1177, %v1398
        %v1409 = vmul.f32 %v1181, %v1398
        %v1410 = vmul.f32 %v1185, %v1398
        %v1411 = vmul.f32 %v1189, %v1398
        %v1412 = vmul.f32 %v1193, %v1398
        %v1413 = vmul.f32 %v1197, %v1398
        %v1414 = vmul.f32 %v1201, %v1398
        %v1415 = vmul.f32 %v1205, %v1398
        %v1416 = vmul.f32 %v1209, %v1398
        %v1417 = vmul.f32 %v1213, %v1398
        %v1418 = vmul.f32 %v1217, %v1398
        %v1419 = vmul.f32 %v1221, %v1398
        %v1420 = vmul.f32 %v1225, %v1398
        %v1421 = vmul.f32 %v1229, %v1398
        %v1422 = vmul.f32 %v1233, %v1398
        %v1423 = vmul.f32 %v1237, %v1398
        %v1424 = vmul.f32 %v1241, %v1398
        %v1425 = vmul.f32 %v1245, %v1398
        %v1426 = vmul.f32 %v1249, %v1398
        %v1427 = vmul.f32 %v1253, %v1398
        %v1428 = vmul.f32 %v1257, %v1398
        %v1429 = vmul.f32 %v1261, %v1398
        %v1430 = vmul.f32 %v1265, %v1398
        %v1431 = vmul.f32 %v1269, %v1398
        %v1432 = vmul.f32 %v1273, %v1398
        %v1433 = vmul.f32 %v1277, %v1398
        %v1434 = vmul.f32 %v1281, %v1398
        %v1435 = vmul.f32 %v1285, %v1398
        %v1436 = vmul.f32 %v1289, %v1398
        %v1437 = vmul.f32 %v1293, %v1398
        %v1438 = vmul.f32 %v1297, %v1398
        %v1439 = vmul.f32 %v1301, %v1398
        %v1440 = vmul.f32 %v1305, %v1398
        %v1441 = vmul.f32 %v1309, %v1398
        %v1442 = vmul.f32 %v1313, %v1398
        %v1443 = vmul.f32 %v1317, %v1398
        %v1444 = vmul.f32 %v1321, %v1398
        %v1445 = vmul.f32 %v1325, %v1398
        %v1446 = vmul.f32 %v1329, %v1398
        %v1447 = vmul.f32 %v1333, %v1398
        %v1448 = vmul.f32 %v1337, %v1398
        %v1449 = vmul.f32 %v1341, %v1398
        %v1450 = vmul.f32 %v1345, %v1398
        %v1451 = vmul.f32 %v1349, %v1398
        %v1452 = vmul.f32 %v1353, %v1398
        %v1453 = vmul.f32 %v1357, %v1398
        %v1454 = vmul.f32 %v1361, %v1398
        %v1455 = vmul.f32 %v1365, %v1398
        %v1456 = vmul.f32 %v1369, %v1398
        %v1457 = vmul.f32 %v1373, %v1398
        %v1458 = vmul.f32 %v1377, %v1398
        %v1459 = vmul.f32 %v1381, %v1398
        %v1460 = vmul.f32 %v1385, %v1398
        %v1461 = vmul.f32 %v1389, %v1398
        %v1462 = vmul.f32 %v1393, %v1398
        %v1463 = vadd.f32 %v1075, %v1399
        %v1464 = vadd.f32 %v1076, %v1400
        %v1465 = vadd.f32 %v1077, %v1401
        %v1466 = vadd.f32 %v1078, %v1402
        %v1467 = vadd.f32 %v1079, %v1403
        %v1468 = vadd.f32 %v1080, %v1404
        %v1469 = vadd.f32 %v1081, %v1405
        %v1470 = vadd.f32 %v1082, %v1406
        %v1471 = vadd.f32 %v1083, %v1407
        %v1472 = vadd.f32 %v1084, %v1408
        %v1473 = vadd.f32 %v1085, %v1409
        %v1474 = vadd.f32 %v1086, %v1410
        %v1475 = vadd.f32 %v1087, %v1411
        %v1476 = vadd.f32 %v1088, %v1412
        %v1477 = vadd.f32 %v1089, %v1413
        %v1478 = vadd.f32 %v1090, %v1414
        %v1479 = vadd.f32 %v1091, %v1415
        %v1480 = vadd.f32 %v1092, %v1416
        %v1481 = vadd.f32 %v1093, %v1417
        %v1482 = vadd.f32 %v1094, %v1418
        %v1483 = vadd.f32 %v1095, %v1419
        %v1484 = vadd.f32 %v1096, %v1420
        %v1485 = vadd.f32 %v1097, %v1421
        %v1486 = vadd.f32 %v1098, %v1422
        %v1487 = vadd.f32 %v1099, %v1423
        %v1488 = vadd.f32 %v1100, %v1424
        %v1489 = vadd.f32 %v1101, %v1425
        %v1490 = vadd.f32 %v1102, %v1426
        %v1491 = vadd.f32 %v1103, %v1427
        %v1492 = vadd.f32 %v1104, %v1428
        %v1493 = vadd.f32 %v1105, %v1429
        %v1494 = vadd.f32 %v1106, %v1430
        %v1495 = vadd.f32 %v1107, %v1431
        %v1496 = vadd.f32 %v1108, %v1432
        %v1497 = vadd.f32 %v1109, %v1433
        %v1498 = vadd.f32 %v1110, %v1434
        %v1499 = vadd.f32 %v1111, %v1435
        %v1500 = vadd.f32 %v1112, %v1436
        %v1501 = vadd.f32 %v1113, %v1437
        %v1502 = vadd.f32 %v1114, %v1438
        %v1503 = vadd.f32 %v1115, %v1439
        %v1504 = vadd.f32 %v1116, %v1440
        %v1505 = vadd.f32 %v1117, %v1441
        %v1506 = vadd.f32 %v1118, %v1442
        %v1507 = vadd.f32 %v1119, %v1443
        %v1508 = vadd.f32 %v1120, %v1444
        %v1509 = vadd.f32 %v1121, %v1445
        %v1510 = vadd.f32 %v1122, %v1446
        %v1511 = vadd.f32 %v1123, %v1447
        %v1512 = vadd.f32 %v1124, %v1448
        %v1513 = vadd.f32 %v1125, %v1449
        %v1514 = vadd.f32 %v1126, %v1450
        %v1515 = vadd.f32 %v1127, %v1451
        %v1516 = vadd.f32 %v1128, %v1452
        %v1517 = vadd.f32 %v1129, %v1453
        %v1518 = vadd.f32 %v1130, %v1454
        %v1519 = vadd.f32 %v1131, %v1455
        %v1520 = vadd.f32 %v1132, %v1456
        %v1521 = vadd.f32 %v1133, %v1457
        %v1522 = vadd.f32 %v1134, %v1458
        %v1523 = vadd.f32 %v1135, %v1459
        %v1524 = vadd.f32 %v1136, %v1460
        %v1525 = vadd.f32 %v1137, %v1461
        %v1526 = vadd.f32 %v1138, %v1462
        %1527 = vset.pattern.permute.xlu0 3
        %1528 = vperm.xlu0 %1527, %v227
        %v1529 = vpop.permute.xlu0 %1528
        %1531 = vset.pattern.permute.xlu0 3
        %1532 = vperm.xlu0 %1531, %v228
        %v1533 = vpop.permute.xlu0 %1532
        %1535 = vset.pattern.permute.xlu0 3
        %1536 = vperm.xlu0 %1535, %v229
        %v1537 = vpop.permute.xlu0 %1536
        %1539 = vset.pattern.permute.xlu0 3
        %1540 = vperm.xlu0 %1539, %v230
        %v1541 = vpop.permute.xlu0 %1540
        %1543 = vset.pattern.permute.xlu0 3
        %1544 = vperm.xlu0 %1543, %v231
        %v1545 = vpop.permute.xlu0 %1544
        %1547 = vset.pattern.permute.xlu0 3
        %1548 = vperm.xlu0 %1547, %v232
        %v1549 = vpop.permute.xlu0 %1548
        %1551 = vset.pattern.permute.xlu0 3
        %1552 = vperm.xlu0 %1551, %v233
        %v1553 = vpop.permute.xlu0 %1552
        %1555 = vset.pattern.permute.xlu0 3
        %1556 = vperm.xlu0 %1555, %v234
        %v1557 = vpop.permute.xlu0 %1556
        %1559 = vset.pattern.permute.xlu0 3
        %1560 = vperm.xlu0 %1559, %v235
        %v1561 = vpop.permute.xlu0 %1560
        %1563 = vset.pattern.permute.xlu0 3
        %1564 = vperm.xlu0 %1563, %v236
        %v1565 = vpop.permute.xlu0 %1564
        %1567 = vset.pattern.permute.xlu0 3
        %1568 = vperm.xlu0 %1567, %v237
        %v1569 = vpop.permute.xlu0 %1568
        %1571 = vset.pattern.permute.xlu0 3
        %1572 = vperm.xlu0 %1571, %v238
        %v1573 = vpop.permute.xlu0 %1572
        %1575 = vset.pattern.permute.xlu0 3
        %1576 = vperm.xlu0 %1575, %v239
        %v1577 = vpop.permute.xlu0 %1576
        %1579 = vset.pattern.permute.xlu0 3
        %1580 = vperm.xlu0 %1579, %v240
        %v1581 = vpop.permute.xlu0 %1580
        %1583 = vset.pattern.permute.xlu0 3
        %1584 = vperm.xlu0 %1583, %v241
        %v1585 = vpop.permute.xlu0 %1584
        %1587 = vset.pattern.permute.xlu0 3
        %1588 = vperm.xlu0 %1587, %v242
        %v1589 = vpop.permute.xlu0 %1588
        %1591 = vset.pattern.permute.xlu0 3
        %1592 = vperm.xlu0 %1591, %v243
        %v1593 = vpop.permute.xlu0 %1592
        %1595 = vset.pattern.permute.xlu0 3
        %1596 = vperm.xlu0 %1595, %v244
        %v1597 = vpop.permute.xlu0 %1596
        %1599 = vset.pattern.permute.xlu0 3
        %1600 = vperm.xlu0 %1599, %v245
        %v1601 = vpop.permute.xlu0 %1600
        %1603 = vset.pattern.permute.xlu0 3
        %1604 = vperm.xlu0 %1603, %v246
        %v1605 = vpop.permute.xlu0 %1604
        %1607 = vset.pattern.permute.xlu0 3
        %1608 = vperm.xlu0 %1607, %v247
        %v1609 = vpop.permute.xlu0 %1608
        %1611 = vset.pattern.permute.xlu0 3
        %1612 = vperm.xlu0 %1611, %v248
        %v1613 = vpop.permute.xlu0 %1612
        %1615 = vset.pattern.permute.xlu0 3
        %1616 = vperm.xlu0 %1615, %v249
        %v1617 = vpop.permute.xlu0 %1616
        %1619 = vset.pattern.permute.xlu0 3
        %1620 = vperm.xlu0 %1619, %v250
        %v1621 = vpop.permute.xlu0 %1620
        %1623 = vset.pattern.permute.xlu0 3
        %1624 = vperm.xlu0 %1623, %v251
        %v1625 = vpop.permute.xlu0 %1624
        %1627 = vset.pattern.permute.xlu0 3
        %1628 = vperm.xlu0 %1627, %v252
        %v1629 = vpop.permute.xlu0 %1628
        %1631 = vset.pattern.permute.xlu0 3
        %1632 = vperm.xlu0 %1631, %v253
        %v1633 = vpop.permute.xlu0 %1632
        %1635 = vset.pattern.permute.xlu0 3
        %1636 = vperm.xlu0 %1635, %v254
        %v1637 = vpop.permute.xlu0 %1636
        %1639 = vset.pattern.permute.xlu0 3
        %1640 = vperm.xlu0 %1639, %v255
        %v1641 = vpop.permute.xlu0 %1640
        %1643 = vset.pattern.permute.xlu0 3
        %1644 = vperm.xlu0 %1643, %v256
        %v1645 = vpop.permute.xlu0 %1644
        %1647 = vset.pattern.permute.xlu0 3
        %1648 = vperm.xlu0 %1647, %v257
        %v1649 = vpop.permute.xlu0 %1648
        %1651 = vset.pattern.permute.xlu0 3
        %1652 = vperm.xlu0 %1651, %v258
        %v1653 = vpop.permute.xlu0 %1652
        %1655 = vset.pattern.permute.xlu0 3
        %1656 = vperm.xlu0 %1655, %v259
        %v1657 = vpop.permute.xlu0 %1656
        %1659 = vset.pattern.permute.xlu0 3
        %1660 = vperm.xlu0 %1659, %v260
        %v1661 = vpop.permute.xlu0 %1660
        %1663 = vset.pattern.permute.xlu0 3
        %1664 = vperm.xlu0 %1663, %v261
        %v1665 = vpop.permute.xlu0 %1664
        %1667 = vset.pattern.permute.xlu0 3
        %1668 = vperm.xlu0 %1667, %v262
        %v1669 = vpop.permute.xlu0 %1668
        %1671 = vset.pattern.permute.xlu0 3
        %1672 = vperm.xlu0 %1671, %v263
        %v1673 = vpop.permute.xlu0 %1672
        %1675 = vset.pattern.permute.xlu0 3
        %1676 = vperm.xlu0 %1675, %v264
        %v1677 = vpop.permute.xlu0 %1676
        %1679 = vset.pattern.permute.xlu0 3
        %1680 = vperm.xlu0 %1679, %v265
        %v1681 = vpop.permute.xlu0 %1680
        %1683 = vset.pattern.permute.xlu0 3
        %1684 = vperm.xlu0 %1683, %v266
        %v1685 = vpop.permute.xlu0 %1684
        %1687 = vset.pattern.permute.xlu0 3
        %1688 = vperm.xlu0 %1687, %v267
        %v1689 = vpop.permute.xlu0 %1688
        %1691 = vset.pattern.permute.xlu0 3
        %1692 = vperm.xlu0 %1691, %v268
        %v1693 = vpop.permute.xlu0 %1692
        %1695 = vset.pattern.permute.xlu0 3
        %1696 = vperm.xlu0 %1695, %v269
        %v1697 = vpop.permute.xlu0 %1696
        %1699 = vset.pattern.permute.xlu0 3
        %1700 = vperm.xlu0 %1699, %v270
        %v1701 = vpop.permute.xlu0 %1700
        %1703 = vset.pattern.permute.xlu0 3
        %1704 = vperm.xlu0 %1703, %v271
        %v1705 = vpop.permute.xlu0 %1704
        %1707 = vset.pattern.permute.xlu0 3
        %1708 = vperm.xlu0 %1707, %v272
        %v1709 = vpop.permute.xlu0 %1708
        %1711 = vset.pattern.permute.xlu0 3
        %1712 = vperm.xlu0 %1711, %v273
        %v1713 = vpop.permute.xlu0 %1712
        %1715 = vset.pattern.permute.xlu0 3
        %1716 = vperm.xlu0 %1715, %v274
        %v1717 = vpop.permute.xlu0 %1716
        %1719 = vset.pattern.permute.xlu0 3
        %1720 = vperm.xlu0 %1719, %v275
        %v1721 = vpop.permute.xlu0 %1720
        %1723 = vset.pattern.permute.xlu0 3
        %1724 = vperm.xlu0 %1723, %v276
        %v1725 = vpop.permute.xlu0 %1724
        %1727 = vset.pattern.permute.xlu0 3
        %1728 = vperm.xlu0 %1727, %v277
        %v1729 = vpop.permute.xlu0 %1728
        %1731 = vset.pattern.permute.xlu0 3
        %1732 = vperm.xlu0 %1731, %v278
        %v1733 = vpop.permute.xlu0 %1732
        %1735 = vset.pattern.permute.xlu0 3
        %1736 = vperm.xlu0 %1735, %v279
        %v1737 = vpop.permute.xlu0 %1736
        %1739 = vset.pattern.permute.xlu0 3
        %1740 = vperm.xlu0 %1739, %v280
        %v1741 = vpop.permute.xlu0 %1740
        %1743 = vset.pattern.permute.xlu0 3
        %1744 = vperm.xlu0 %1743, %v281
        %v1745 = vpop.permute.xlu0 %1744
        %1747 = vset.pattern.permute.xlu0 3
        %1748 = vperm.xlu0 %1747, %v282
        %v1749 = vpop.permute.xlu0 %1748
        %1751 = vset.pattern.permute.xlu0 3
        %1752 = vperm.xlu0 %1751, %v283
        %v1753 = vpop.permute.xlu0 %1752
        %1755 = vset.pattern.permute.xlu0 3
        %1756 = vperm.xlu0 %1755, %v284
        %v1757 = vpop.permute.xlu0 %1756
        %1759 = vset.pattern.permute.xlu0 3
        %1760 = vperm.xlu0 %1759, %v285
        %v1761 = vpop.permute.xlu0 %1760
        %1763 = vset.pattern.permute.xlu0 3
        %1764 = vperm.xlu0 %1763, %v286
        %v1765 = vpop.permute.xlu0 %1764
        %1767 = vset.pattern.permute.xlu0 3
        %1768 = vperm.xlu0 %1767, %v287
        %v1769 = vpop.permute.xlu0 %1768
        %1771 = vset.pattern.permute.xlu0 3
        %1772 = vperm.xlu0 %1771, %v288
        %v1773 = vpop.permute.xlu0 %1772
        %1775 = vset.pattern.permute.xlu0 3
        %1776 = vperm.xlu0 %1775, %v289
        %v1777 = vpop.permute.xlu0 %1776
        %1779 = vset.pattern.permute.xlu0 3
        %1780 = vperm.xlu0 %1779, %v290
        %v1781 = vpop.permute.xlu0 %1780
        %v1783 = vlaneseq
        %v1784 = vshrl.u32 %v1783, 7
        %v1785 = vsub.s32 3, %v1784
        %v1786 = vrot.slane %v291, %v1785
        %v1787 = vmul.f32 %v1529, %v1786
        %v1788 = vmul.f32 %v1533, %v1786
        %v1789 = vmul.f32 %v1537, %v1786
        %v1790 = vmul.f32 %v1541, %v1786
        %v1791 = vmul.f32 %v1545, %v1786
        %v1792 = vmul.f32 %v1549, %v1786
        %v1793 = vmul.f32 %v1553, %v1786
        %v1794 = vmul.f32 %v1557, %v1786
        %v1795 = vmul.f32 %v1561, %v1786
        %v1796 = vmul.f32 %v1565, %v1786
        %v1797 = vmul.f32 %v1569, %v1786
        %v1798 = vmul.f32 %v1573, %v1786
        %v1799 = vmul.f32 %v1577, %v1786
        %v1800 = vmul.f32 %v1581, %v1786
        %v1801 = vmul.f32 %v1585, %v1786
        %v1802 = vmul.f32 %v1589, %v1786
        %v1803 = vmul.f32 %v1593, %v1786
        %v1804 = vmul.f32 %v1597, %v1786
        %v1805 = vmul.f32 %v1601, %v1786
        %v1806 = vmul.f32 %v1605, %v1786
        %v1807 = vmul.f32 %v1609, %v1786
        %v1808 = vmul.f32 %v1613, %v1786
        %v1809 = vmul.f32 %v1617, %v1786
        %v1810 = vmul.f32 %v1621, %v1786
        %v1811 = vmul.f32 %v1625, %v1786
        %v1812 = vmul.f32 %v1629, %v1786
        %v1813 = vmul.f32 %v1633, %v1786
        %v1814 = vmul.f32 %v1637, %v1786
        %v1815 = vmul.f32 %v1641, %v1786
        %v1816 = vmul.f32 %v1645, %v1786
        %v1817 = vmul.f32 %v1649, %v1786
        %v1818 = vmul.f32 %v1653, %v1786
        %v1819 = vmul.f32 %v1657, %v1786
        %v1820 = vmul.f32 %v1661, %v1786
        %v1821 = vmul.f32 %v1665, %v1786
        %v1822 = vmul.f32 %v1669, %v1786
        %v1823 = vmul.f32 %v1673, %v1786
        %v1824 = vmul.f32 %v1677, %v1786
        %v1825 = vmul.f32 %v1681, %v1786
        %v1826 = vmul.f32 %v1685, %v1786
        %v1827 = vmul.f32 %v1689, %v1786
        %v1828 = vmul.f32 %v1693, %v1786
        %v1829 = vmul.f32 %v1697, %v1786
        %v1830 = vmul.f32 %v1701, %v1786
        %v1831 = vmul.f32 %v1705, %v1786
        %v1832 = vmul.f32 %v1709, %v1786
        %v1833 = vmul.f32 %v1713, %v1786
        %v1834 = vmul.f32 %v1717, %v1786
        %v1835 = vmul.f32 %v1721, %v1786
        %v1836 = vmul.f32 %v1725, %v1786
        %v1837 = vmul.f32 %v1729, %v1786
        %v1838 = vmul.f32 %v1733, %v1786
        %v1839 = vmul.f32 %v1737, %v1786
        %v1840 = vmul.f32 %v1741, %v1786
        %v1841 = vmul.f32 %v1745, %v1786
        %v1842 = vmul.f32 %v1749, %v1786
        %v1843 = vmul.f32 %v1753, %v1786
        %v1844 = vmul.f32 %v1757, %v1786
        %v1845 = vmul.f32 %v1761, %v1786
        %v1846 = vmul.f32 %v1765, %v1786
        %v1847 = vmul.f32 %v1769, %v1786
        %v1848 = vmul.f32 %v1773, %v1786
        %v1849 = vmul.f32 %v1777, %v1786
        %v1850 = vmul.f32 %v1781, %v1786
        %v1851 = vadd.f32 %v1463, %v1787
        %v1852 = vadd.f32 %v1464, %v1788
        %v1853 = vadd.f32 %v1465, %v1789
        %v1854 = vadd.f32 %v1466, %v1790
        %v1855 = vadd.f32 %v1467, %v1791
        %v1856 = vadd.f32 %v1468, %v1792
        %v1857 = vadd.f32 %v1469, %v1793
        %v1858 = vadd.f32 %v1470, %v1794
        %v1859 = vadd.f32 %v1471, %v1795
        %v1860 = vadd.f32 %v1472, %v1796
        %v1861 = vadd.f32 %v1473, %v1797
        %v1862 = vadd.f32 %v1474, %v1798
        %v1863 = vadd.f32 %v1475, %v1799
        %v1864 = vadd.f32 %v1476, %v1800
        %v1865 = vadd.f32 %v1477, %v1801
        %v1866 = vadd.f32 %v1478, %v1802
        %v1867 = vadd.f32 %v1479, %v1803
        %v1868 = vadd.f32 %v1480, %v1804
        %v1869 = vadd.f32 %v1481, %v1805
        %v1870 = vadd.f32 %v1482, %v1806
        %v1871 = vadd.f32 %v1483, %v1807
        %v1872 = vadd.f32 %v1484, %v1808
        %v1873 = vadd.f32 %v1485, %v1809
        %v1874 = vadd.f32 %v1486, %v1810
        %v1875 = vadd.f32 %v1487, %v1811
        %v1876 = vadd.f32 %v1488, %v1812
        %v1877 = vadd.f32 %v1489, %v1813
        %v1878 = vadd.f32 %v1490, %v1814
        %v1879 = vadd.f32 %v1491, %v1815
        %v1880 = vadd.f32 %v1492, %v1816
        %v1881 = vadd.f32 %v1493, %v1817
        %v1882 = vadd.f32 %v1494, %v1818
        %v1883 = vadd.f32 %v1495, %v1819
        %v1884 = vadd.f32 %v1496, %v1820
        %v1885 = vadd.f32 %v1497, %v1821
        %v1886 = vadd.f32 %v1498, %v1822
        %v1887 = vadd.f32 %v1499, %v1823
        %v1888 = vadd.f32 %v1500, %v1824
        %v1889 = vadd.f32 %v1501, %v1825
        %v1890 = vadd.f32 %v1502, %v1826
        %v1891 = vadd.f32 %v1503, %v1827
        %v1892 = vadd.f32 %v1504, %v1828
        %v1893 = vadd.f32 %v1505, %v1829
        %v1894 = vadd.f32 %v1506, %v1830
        %v1895 = vadd.f32 %v1507, %v1831
        %v1896 = vadd.f32 %v1508, %v1832
        %v1897 = vadd.f32 %v1509, %v1833
        %v1898 = vadd.f32 %v1510, %v1834
        %v1899 = vadd.f32 %v1511, %v1835
        %v1900 = vadd.f32 %v1512, %v1836
        %v1901 = vadd.f32 %v1513, %v1837
        %v1902 = vadd.f32 %v1514, %v1838
        %v1903 = vadd.f32 %v1515, %v1839
        %v1904 = vadd.f32 %v1516, %v1840
        %v1905 = vadd.f32 %v1517, %v1841
        %v1906 = vadd.f32 %v1518, %v1842
        %v1907 = vadd.f32 %v1519, %v1843
        %v1908 = vadd.f32 %v1520, %v1844
        %v1909 = vadd.f32 %v1521, %v1845
        %v1910 = vadd.f32 %v1522, %v1846
        %v1911 = vadd.f32 %v1523, %v1847
        %v1912 = vadd.f32 %v1524, %v1848
        %v1913 = vadd.f32 %v1525, %v1849
        %v1914 = vadd.f32 %v1526, %v1850
        %1915 = vset.pattern.permute.xlu0 4
        %1916 = vperm.xlu0 %1915, %v227
        %v1917 = vpop.permute.xlu0 %1916
        %1919 = vset.pattern.permute.xlu0 4
        %1920 = vperm.xlu0 %1919, %v228
        %v1921 = vpop.permute.xlu0 %1920
        %1923 = vset.pattern.permute.xlu0 4
        %1924 = vperm.xlu0 %1923, %v229
        %v1925 = vpop.permute.xlu0 %1924
        %1927 = vset.pattern.permute.xlu0 4
        %1928 = vperm.xlu0 %1927, %v230
        %v1929 = vpop.permute.xlu0 %1928
        %1931 = vset.pattern.permute.xlu0 4
        %1932 = vperm.xlu0 %1931, %v231
        %v1933 = vpop.permute.xlu0 %1932
        %1935 = vset.pattern.permute.xlu0 4
        %1936 = vperm.xlu0 %1935, %v232
        %v1937 = vpop.permute.xlu0 %1936
        %1939 = vset.pattern.permute.xlu0 4
        %1940 = vperm.xlu0 %1939, %v233
        %v1941 = vpop.permute.xlu0 %1940
        %1943 = vset.pattern.permute.xlu0 4
        %1944 = vperm.xlu0 %1943, %v234
        %v1945 = vpop.permute.xlu0 %1944
        %1947 = vset.pattern.permute.xlu0 4
        %1948 = vperm.xlu0 %1947, %v235
        %v1949 = vpop.permute.xlu0 %1948
        %1951 = vset.pattern.permute.xlu0 4
        %1952 = vperm.xlu0 %1951, %v236
        %v1953 = vpop.permute.xlu0 %1952
        %1955 = vset.pattern.permute.xlu0 4
        %1956 = vperm.xlu0 %1955, %v237
        %v1957 = vpop.permute.xlu0 %1956
        %1959 = vset.pattern.permute.xlu0 4
        %1960 = vperm.xlu0 %1959, %v238
        %v1961 = vpop.permute.xlu0 %1960
        %1963 = vset.pattern.permute.xlu0 4
        %1964 = vperm.xlu0 %1963, %v239
        %v1965 = vpop.permute.xlu0 %1964
        %1967 = vset.pattern.permute.xlu0 4
        %1968 = vperm.xlu0 %1967, %v240
        %v1969 = vpop.permute.xlu0 %1968
        %1971 = vset.pattern.permute.xlu0 4
        %1972 = vperm.xlu0 %1971, %v241
        %v1973 = vpop.permute.xlu0 %1972
        %1975 = vset.pattern.permute.xlu0 4
        %1976 = vperm.xlu0 %1975, %v242
        %v1977 = vpop.permute.xlu0 %1976
        %1979 = vset.pattern.permute.xlu0 4
        %1980 = vperm.xlu0 %1979, %v243
        %v1981 = vpop.permute.xlu0 %1980
        %1983 = vset.pattern.permute.xlu0 4
        %1984 = vperm.xlu0 %1983, %v244
        %v1985 = vpop.permute.xlu0 %1984
        %1987 = vset.pattern.permute.xlu0 4
        %1988 = vperm.xlu0 %1987, %v245
        %v1989 = vpop.permute.xlu0 %1988
        %1991 = vset.pattern.permute.xlu0 4
        %1992 = vperm.xlu0 %1991, %v246
        %v1993 = vpop.permute.xlu0 %1992
        %1995 = vset.pattern.permute.xlu0 4
        %1996 = vperm.xlu0 %1995, %v247
        %v1997 = vpop.permute.xlu0 %1996
        %1999 = vset.pattern.permute.xlu0 4
        %2000 = vperm.xlu0 %1999, %v248
        %v2001 = vpop.permute.xlu0 %2000
        %2003 = vset.pattern.permute.xlu0 4
        %2004 = vperm.xlu0 %2003, %v249
        %v2005 = vpop.permute.xlu0 %2004
        %2007 = vset.pattern.permute.xlu0 4
        %2008 = vperm.xlu0 %2007, %v250
        %v2009 = vpop.permute.xlu0 %2008
        %2011 = vset.pattern.permute.xlu0 4
        %2012 = vperm.xlu0 %2011, %v251
        %v2013 = vpop.permute.xlu0 %2012
        %2015 = vset.pattern.permute.xlu0 4
        %2016 = vperm.xlu0 %2015, %v252
        %v2017 = vpop.permute.xlu0 %2016
        %2019 = vset.pattern.permute.xlu0 4
        %2020 = vperm.xlu0 %2019, %v253
        %v2021 = vpop.permute.xlu0 %2020
        %2023 = vset.pattern.permute.xlu0 4
        %2024 = vperm.xlu0 %2023, %v254
        %v2025 = vpop.permute.xlu0 %2024
        %2027 = vset.pattern.permute.xlu0 4
        %2028 = vperm.xlu0 %2027, %v255
        %v2029 = vpop.permute.xlu0 %2028
        %2031 = vset.pattern.permute.xlu0 4
        %2032 = vperm.xlu0 %2031, %v256
        %v2033 = vpop.permute.xlu0 %2032
        %2035 = vset.pattern.permute.xlu0 4
        %2036 = vperm.xlu0 %2035, %v257
        %v2037 = vpop.permute.xlu0 %2036
        %2039 = vset.pattern.permute.xlu0 4
        %2040 = vperm.xlu0 %2039, %v258
        %v2041 = vpop.permute.xlu0 %2040
        %2043 = vset.pattern.permute.xlu0 4
        %2044 = vperm.xlu0 %2043, %v259
        %v2045 = vpop.permute.xlu0 %2044
        %2047 = vset.pattern.permute.xlu0 4
        %2048 = vperm.xlu0 %2047, %v260
        %v2049 = vpop.permute.xlu0 %2048
        %2051 = vset.pattern.permute.xlu0 4
        %2052 = vperm.xlu0 %2051, %v261
        %v2053 = vpop.permute.xlu0 %2052
        %2055 = vset.pattern.permute.xlu0 4
        %2056 = vperm.xlu0 %2055, %v262
        %v2057 = vpop.permute.xlu0 %2056
        %2059 = vset.pattern.permute.xlu0 4
        %2060 = vperm.xlu0 %2059, %v263
        %v2061 = vpop.permute.xlu0 %2060
        %2063 = vset.pattern.permute.xlu0 4
        %2064 = vperm.xlu0 %2063, %v264
        %v2065 = vpop.permute.xlu0 %2064
        %2067 = vset.pattern.permute.xlu0 4
        %2068 = vperm.xlu0 %2067, %v265
        %v2069 = vpop.permute.xlu0 %2068
        %2071 = vset.pattern.permute.xlu0 4
        %2072 = vperm.xlu0 %2071, %v266
        %v2073 = vpop.permute.xlu0 %2072
        %2075 = vset.pattern.permute.xlu0 4
        %2076 = vperm.xlu0 %2075, %v267
        %v2077 = vpop.permute.xlu0 %2076
        %2079 = vset.pattern.permute.xlu0 4
        %2080 = vperm.xlu0 %2079, %v268
        %v2081 = vpop.permute.xlu0 %2080
        %2083 = vset.pattern.permute.xlu0 4
        %2084 = vperm.xlu0 %2083, %v269
        %v2085 = vpop.permute.xlu0 %2084
        %2087 = vset.pattern.permute.xlu0 4
        %2088 = vperm.xlu0 %2087, %v270
        %v2089 = vpop.permute.xlu0 %2088
        %2091 = vset.pattern.permute.xlu0 4
        %2092 = vperm.xlu0 %2091, %v271
        %v2093 = vpop.permute.xlu0 %2092
        %2095 = vset.pattern.permute.xlu0 4
        %2096 = vperm.xlu0 %2095, %v272
        %v2097 = vpop.permute.xlu0 %2096
        %2099 = vset.pattern.permute.xlu0 4
        %2100 = vperm.xlu0 %2099, %v273
        %v2101 = vpop.permute.xlu0 %2100
        %2103 = vset.pattern.permute.xlu0 4
        %2104 = vperm.xlu0 %2103, %v274
        %v2105 = vpop.permute.xlu0 %2104
        %2107 = vset.pattern.permute.xlu0 4
        %2108 = vperm.xlu0 %2107, %v275
        %v2109 = vpop.permute.xlu0 %2108
        %2111 = vset.pattern.permute.xlu0 4
        %2112 = vperm.xlu0 %2111, %v276
        %v2113 = vpop.permute.xlu0 %2112
        %2115 = vset.pattern.permute.xlu0 4
        %2116 = vperm.xlu0 %2115, %v277
        %v2117 = vpop.permute.xlu0 %2116
        %2119 = vset.pattern.permute.xlu0 4
        %2120 = vperm.xlu0 %2119, %v278
        %v2121 = vpop.permute.xlu0 %2120
        %2123 = vset.pattern.permute.xlu0 4
        %2124 = vperm.xlu0 %2123, %v279
        %v2125 = vpop.permute.xlu0 %2124
        %2127 = vset.pattern.permute.xlu0 4
        %2128 = vperm.xlu0 %2127, %v280
        %v2129 = vpop.permute.xlu0 %2128
        %2131 = vset.pattern.permute.xlu0 4
        %2132 = vperm.xlu0 %2131, %v281
        %v2133 = vpop.permute.xlu0 %2132
        %2135 = vset.pattern.permute.xlu0 4
        %2136 = vperm.xlu0 %2135, %v282
        %v2137 = vpop.permute.xlu0 %2136
        %2139 = vset.pattern.permute.xlu0 4
        %2140 = vperm.xlu0 %2139, %v283
        %v2141 = vpop.permute.xlu0 %2140
        %2143 = vset.pattern.permute.xlu0 4
        %2144 = vperm.xlu0 %2143, %v284
        %v2145 = vpop.permute.xlu0 %2144
        %2147 = vset.pattern.permute.xlu0 4
        %2148 = vperm.xlu0 %2147, %v285
        %v2149 = vpop.permute.xlu0 %2148
        %2151 = vset.pattern.permute.xlu0 4
        %2152 = vperm.xlu0 %2151, %v286
        %v2153 = vpop.permute.xlu0 %2152
        %2155 = vset.pattern.permute.xlu0 4
        %2156 = vperm.xlu0 %2155, %v287
        %v2157 = vpop.permute.xlu0 %2156
        %2159 = vset.pattern.permute.xlu0 4
        %2160 = vperm.xlu0 %2159, %v288
        %v2161 = vpop.permute.xlu0 %2160
        %2163 = vset.pattern.permute.xlu0 4
        %2164 = vperm.xlu0 %2163, %v289
        %v2165 = vpop.permute.xlu0 %2164
        %2167 = vset.pattern.permute.xlu0 4
        %2168 = vperm.xlu0 %2167, %v290
        %v2169 = vpop.permute.xlu0 %2168
        %v2171 = vlaneseq
        %v2172 = vshrl.u32 %v2171, 7
        %v2173 = vsub.s32 4, %v2172
        %v2174 = vrot.slane %v291, %v2173
        %v2175 = vmul.f32 %v1917, %v2174
        %v2176 = vmul.f32 %v1921, %v2174
        %v2177 = vmul.f32 %v1925, %v2174
        %v2178 = vmul.f32 %v1929, %v2174
        %v2179 = vmul.f32 %v1933, %v2174
        %v2180 = vmul.f32 %v1937, %v2174
        %v2181 = vmul.f32 %v1941, %v2174
        %v2182 = vmul.f32 %v1945, %v2174
        %v2183 = vmul.f32 %v1949, %v2174
        %v2184 = vmul.f32 %v1953, %v2174
        %v2185 = vmul.f32 %v1957, %v2174
        %v2186 = vmul.f32 %v1961, %v2174
        %v2187 = vmul.f32 %v1965, %v2174
        %v2188 = vmul.f32 %v1969, %v2174
        %v2189 = vmul.f32 %v1973, %v2174
        %v2190 = vmul.f32 %v1977, %v2174
        %v2191 = vmul.f32 %v1981, %v2174
        %v2192 = vmul.f32 %v1985, %v2174
        %v2193 = vmul.f32 %v1989, %v2174
        %v2194 = vmul.f32 %v1993, %v2174
        %v2195 = vmul.f32 %v1997, %v2174
        %v2196 = vmul.f32 %v2001, %v2174
        %v2197 = vmul.f32 %v2005, %v2174
        %v2198 = vmul.f32 %v2009, %v2174
        %v2199 = vmul.f32 %v2013, %v2174
        %v2200 = vmul.f32 %v2017, %v2174
        %v2201 = vmul.f32 %v2021, %v2174
        %v2202 = vmul.f32 %v2025, %v2174
        %v2203 = vmul.f32 %v2029, %v2174
        %v2204 = vmul.f32 %v2033, %v2174
        %v2205 = vmul.f32 %v2037, %v2174
        %v2206 = vmul.f32 %v2041, %v2174
        %v2207 = vmul.f32 %v2045, %v2174
        %v2208 = vmul.f32 %v2049, %v2174
        %v2209 = vmul.f32 %v2053, %v2174
        %v2210 = vmul.f32 %v2057, %v2174
        %v2211 = vmul.f32 %v2061, %v2174
        %v2212 = vmul.f32 %v2065, %v2174
        %v2213 = vmul.f32 %v2069, %v2174
        %v2214 = vmul.f32 %v2073, %v2174
        %v2215 = vmul.f32 %v2077, %v2174
        %v2216 = vmul.f32 %v2081, %v2174
        %v2217 = vmul.f32 %v2085, %v2174
        %v2218 = vmul.f32 %v2089, %v2174
        %v2219 = vmul.f32 %v2093, %v2174
        %v2220 = vmul.f32 %v2097, %v2174
        %v2221 = vmul.f32 %v2101, %v2174
        %v2222 = vmul.f32 %v2105, %v2174
        %v2223 = vmul.f32 %v2109, %v2174
        %v2224 = vmul.f32 %v2113, %v2174
        %v2225 = vmul.f32 %v2117, %v2174
        %v2226 = vmul.f32 %v2121, %v2174
        %v2227 = vmul.f32 %v2125, %v2174
        %v2228 = vmul.f32 %v2129, %v2174
        %v2229 = vmul.f32 %v2133, %v2174
        %v2230 = vmul.f32 %v2137, %v2174
        %v2231 = vmul.f32 %v2141, %v2174
        %v2232 = vmul.f32 %v2145, %v2174
        %v2233 = vmul.f32 %v2149, %v2174
        %v2234 = vmul.f32 %v2153, %v2174
        %v2235 = vmul.f32 %v2157, %v2174
        %v2236 = vmul.f32 %v2161, %v2174
        %v2237 = vmul.f32 %v2165, %v2174
        %v2238 = vmul.f32 %v2169, %v2174
        %v2239 = vadd.f32 %v1851, %v2175
        %v2240 = vadd.f32 %v1852, %v2176
        %v2241 = vadd.f32 %v1853, %v2177
        %v2242 = vadd.f32 %v1854, %v2178
        %v2243 = vadd.f32 %v1855, %v2179
        %v2244 = vadd.f32 %v1856, %v2180
        %v2245 = vadd.f32 %v1857, %v2181
        %v2246 = vadd.f32 %v1858, %v2182
        %v2247 = vadd.f32 %v1859, %v2183
        %v2248 = vadd.f32 %v1860, %v2184
        %v2249 = vadd.f32 %v1861, %v2185
        %v2250 = vadd.f32 %v1862, %v2186
        %v2251 = vadd.f32 %v1863, %v2187
        %v2252 = vadd.f32 %v1864, %v2188
        %v2253 = vadd.f32 %v1865, %v2189
        %v2254 = vadd.f32 %v1866, %v2190
        %v2255 = vadd.f32 %v1867, %v2191
        %v2256 = vadd.f32 %v1868, %v2192
        %v2257 = vadd.f32 %v1869, %v2193
        %v2258 = vadd.f32 %v1870, %v2194
        %v2259 = vadd.f32 %v1871, %v2195
        %v2260 = vadd.f32 %v1872, %v2196
        %v2261 = vadd.f32 %v1873, %v2197
        %v2262 = vadd.f32 %v1874, %v2198
        %v2263 = vadd.f32 %v1875, %v2199
        %v2264 = vadd.f32 %v1876, %v2200
        %v2265 = vadd.f32 %v1877, %v2201
        %v2266 = vadd.f32 %v1878, %v2202
        %v2267 = vadd.f32 %v1879, %v2203
        %v2268 = vadd.f32 %v1880, %v2204
        %v2269 = vadd.f32 %v1881, %v2205
        %v2270 = vadd.f32 %v1882, %v2206
        %v2271 = vadd.f32 %v1883, %v2207
        %v2272 = vadd.f32 %v1884, %v2208
        %v2273 = vadd.f32 %v1885, %v2209
        %v2274 = vadd.f32 %v1886, %v2210
        %v2275 = vadd.f32 %v1887, %v2211
        %v2276 = vadd.f32 %v1888, %v2212
        %v2277 = vadd.f32 %v1889, %v2213
        %v2278 = vadd.f32 %v1890, %v2214
        %v2279 = vadd.f32 %v1891, %v2215
        %v2280 = vadd.f32 %v1892, %v2216
        %v2281 = vadd.f32 %v1893, %v2217
        %v2282 = vadd.f32 %v1894, %v2218
        %v2283 = vadd.f32 %v1895, %v2219
        %v2284 = vadd.f32 %v1896, %v2220
        %v2285 = vadd.f32 %v1897, %v2221
        %v2286 = vadd.f32 %v1898, %v2222
        %v2287 = vadd.f32 %v1899, %v2223
        %v2288 = vadd.f32 %v1900, %v2224
        %v2289 = vadd.f32 %v1901, %v2225
        %v2290 = vadd.f32 %v1902, %v2226
        %v2291 = vadd.f32 %v1903, %v2227
        %v2292 = vadd.f32 %v1904, %v2228
        %v2293 = vadd.f32 %v1905, %v2229
        %v2294 = vadd.f32 %v1906, %v2230
        %v2295 = vadd.f32 %v1907, %v2231
        %v2296 = vadd.f32 %v1908, %v2232
        %v2297 = vadd.f32 %v1909, %v2233
        %v2298 = vadd.f32 %v1910, %v2234
        %v2299 = vadd.f32 %v1911, %v2235
        %v2300 = vadd.f32 %v1912, %v2236
        %v2301 = vadd.f32 %v1913, %v2237
        %v2302 = vadd.f32 %v1914, %v2238
        %v2303 = vmax.f32 %v2239, 0.0
        %v2304 = vmax.f32 %v2240, 0.0
        %v2305 = vmax.f32 %v2241, 0.0
        %v2306 = vmax.f32 %v2242, 0.0
        %v2307 = vmax.f32 %v2243, 0.0
        %v2308 = vmax.f32 %v2244, 0.0
        %v2309 = vmax.f32 %v2245, 0.0
        %v2310 = vmax.f32 %v2246, 0.0
        %v2311 = vmax.f32 %v2247, 0.0
        %v2312 = vmax.f32 %v2248, 0.0
        %v2313 = vmax.f32 %v2249, 0.0
        %v2314 = vmax.f32 %v2250, 0.0
        %v2315 = vmax.f32 %v2251, 0.0
        %v2316 = vmax.f32 %v2252, 0.0
        %v2317 = vmax.f32 %v2253, 0.0
        %v2318 = vmax.f32 %v2254, 0.0
        %v2319 = vmax.f32 %v2255, 0.0
        %v2320 = vmax.f32 %v2256, 0.0
        %v2321 = vmax.f32 %v2257, 0.0
        %v2322 = vmax.f32 %v2258, 0.0
        %v2323 = vmax.f32 %v2259, 0.0
        %v2324 = vmax.f32 %v2260, 0.0
        %v2325 = vmax.f32 %v2261, 0.0
        %v2326 = vmax.f32 %v2262, 0.0
        %v2327 = vmax.f32 %v2263, 0.0
        %v2328 = vmax.f32 %v2264, 0.0
        %v2329 = vmax.f32 %v2265, 0.0
        %v2330 = vmax.f32 %v2266, 0.0
        %v2331 = vmax.f32 %v2267, 0.0
        %v2332 = vmax.f32 %v2268, 0.0
        %v2333 = vmax.f32 %v2269, 0.0
        %v2334 = vmax.f32 %v2270, 0.0
        %v2335 = vmax.f32 %v2271, 0.0
        %v2336 = vmax.f32 %v2272, 0.0
        %v2337 = vmax.f32 %v2273, 0.0
        %v2338 = vmax.f32 %v2274, 0.0
        %v2339 = vmax.f32 %v2275, 0.0
        %v2340 = vmax.f32 %v2276, 0.0
        %v2341 = vmax.f32 %v2277, 0.0
        %v2342 = vmax.f32 %v2278, 0.0
        %v2343 = vmax.f32 %v2279, 0.0
        %v2344 = vmax.f32 %v2280, 0.0
        %v2345 = vmax.f32 %v2281, 0.0
        %v2346 = vmax.f32 %v2282, 0.0
        %v2347 = vmax.f32 %v2283, 0.0
        %v2348 = vmax.f32 %v2284, 0.0
        %v2349 = vmax.f32 %v2285, 0.0
        %v2350 = vmax.f32 %v2286, 0.0
        %v2351 = vmax.f32 %v2287, 0.0
        %v2352 = vmax.f32 %v2288, 0.0
        %v2353 = vmax.f32 %v2289, 0.0
        %v2354 = vmax.f32 %v2290, 0.0
        %v2355 = vmax.f32 %v2291, 0.0
        %v2356 = vmax.f32 %v2292, 0.0
        %v2357 = vmax.f32 %v2293, 0.0
        %v2358 = vmax.f32 %v2294, 0.0
        %v2359 = vmax.f32 %v2295, 0.0
        %v2360 = vmax.f32 %v2296, 0.0
        %v2361 = vmax.f32 %v2297, 0.0
        %v2362 = vmax.f32 %v2298, 0.0
        %v2363 = vmax.f32 %v2299, 0.0
        %v2364 = vmax.f32 %v2300, 0.0
        %v2365 = vmax.f32 %v2301, 0.0
        %v2366 = vmax.f32 %v2302, 0.0
        %v2367 = vpack.c.bf16 %v2304, %v2303
        %v2368 = vpack.c.bf16 %v2306, %v2305
        %v2369 = vpack.c.bf16 %v2308, %v2307
        %v2370 = vpack.c.bf16 %v2310, %v2309
        %v2371 = vpack.c.bf16 %v2312, %v2311
        %v2372 = vpack.c.bf16 %v2314, %v2313
        %v2373 = vpack.c.bf16 %v2316, %v2315
        %v2374 = vpack.c.bf16 %v2318, %v2317
        %v2375 = vpack.c.bf16 %v2320, %v2319
        %v2376 = vpack.c.bf16 %v2322, %v2321
        %v2377 = vpack.c.bf16 %v2324, %v2323
        %v2378 = vpack.c.bf16 %v2326, %v2325
        %v2379 = vpack.c.bf16 %v2328, %v2327
        %v2380 = vpack.c.bf16 %v2330, %v2329
        %v2381 = vpack.c.bf16 %v2332, %v2331
        %v2382 = vpack.c.bf16 %v2334, %v2333
        %v2383 = vpack.c.bf16 %v2336, %v2335
        %v2384 = vpack.c.bf16 %v2338, %v2337
        %v2385 = vpack.c.bf16 %v2340, %v2339
        %v2386 = vpack.c.bf16 %v2342, %v2341
        %v2387 = vpack.c.bf16 %v2344, %v2343
        %v2388 = vpack.c.bf16 %v2346, %v2345
        %v2389 = vpack.c.bf16 %v2348, %v2347
        %v2390 = vpack.c.bf16 %v2350, %v2349
        %v2391 = vpack.c.bf16 %v2352, %v2351
        %v2392 = vpack.c.bf16 %v2354, %v2353
        %v2393 = vpack.c.bf16 %v2356, %v2355
        %v2394 = vpack.c.bf16 %v2358, %v2357
        %v2395 = vpack.c.bf16 %v2360, %v2359
        %v2396 = vpack.c.bf16 %v2362, %v2361
        %v2397 = vpack.c.bf16 %v2364, %v2363
        %v2398 = vpack.c.bf16 %v2366, %v2365
        %v2399 = vld [vmem:[%s3] sm:$0xf]
        %v2400 = vld [vmem:[%s3 + $0x4] sm:$0xf]
        %v2401 = vld [vmem:[%s3 + $0x8] sm:$0xf]
        %v2402 = vld [vmem:[%s3 + $0xc] sm:$0xf]
        %v2403 = vld [vmem:[%s3 + $0x10] sm:$0xf]
        %v2404 = vld [vmem:[%s3 + $0x14] sm:$0xf]
        %v2405 = vld [vmem:[%s3 + $0x18] sm:$0xf]
        %v2406 = vld [vmem:[%s3 + $0x1c] sm:$0xf]
        %v2407 = vld [vmem:[%s3 + $0x20] sm:$0xf]
        %v2408 = vld [vmem:[%s3 + $0x24] sm:$0xf]
        %v2409 = vld [vmem:[%s3 + $0x28] sm:$0xf]
        %v2410 = vld [vmem:[%s3 + $0x2c] sm:$0xf]
        %v2411 = vld [vmem:[%s3 + $0x30] sm:$0xf]
        %v2412 = vld [vmem:[%s3 + $0x34] sm:$0xf]
        %v2413 = vld [vmem:[%s3 + $0x38] sm:$0xf]
        %v2414 = vld [vmem:[%s3 + $0x3c] sm:$0xf]
        %v2415 = vld [vmem:[%s4] sm:$0x1]
        %v2417 = vlaneseq
        %v2418 = vshrl.u32 %v2417, 7
        %v2419 = vsub.s32 0, %v2418
        %v2420 = vrot.slane %v2415, %v2419
        %v2438 = vunpack.c.l.b16 %v2399
        %v2439 = vunpack.c.l.b16 %v2400
        %v2440 = vunpack.c.l.b16 %v2401
        %v2441 = vunpack.c.l.b16 %v2402
        %v2442 = vunpack.c.l.b16 %v2403
        %v2443 = vunpack.c.l.b16 %v2404
        %v2444 = vunpack.c.l.b16 %v2405
        %v2445 = vunpack.c.l.b16 %v2406
        %v2446 = vunpack.c.l.b16 %v2407
        %v2447 = vunpack.c.l.b16 %v2408
        %v2448 = vunpack.c.l.b16 %v2409
        %v2449 = vunpack.c.l.b16 %v2410
        %v2450 = vunpack.c.l.b16 %v2411
        %v2451 = vunpack.c.l.b16 %v2412
        %v2452 = vunpack.c.l.b16 %v2413
        %v2453 = vunpack.c.l.b16 %v2414
        %v2454 = vpack.c.b16 %v2439, %v2438
        %v2455 = vpack.c.b16 %v2441, %v2440
        %v2456 = vpack.c.b16 %v2443, %v2442
        %v2457 = vpack.c.b16 %v2445, %v2444
        %v2458 = vpack.c.b16 %v2447, %v2446
        %v2459 = vpack.c.b16 %v2449, %v2448
        %v2460 = vpack.c.b16 %v2451, %v2450
        %v2461 = vpack.c.b16 %v2453, %v2452
        %2470 = vmatprep.subr.bf16.mxu0 0
        %2471 = vmatpush1.bf16.msra.mxu0 %v2461
        %2472 = vmatprep.subr.bf16.mxu0 0
        %2473 = vmatpush1.bf16.msra.mxu0 %v2460
        %2474 = vmatprep.subr.bf16.mxu0 0
        %2475 = vmatpush1.bf16.msra.mxu0 %v2459
        %2476 = vmatprep.subr.bf16.mxu0 0
        %2477 = vmatpush1.bf16.msra.mxu0 %v2458
        %2478 = vmatprep.subr.bf16.mxu0 0
        %2479 = vmatpush1.bf16.msra.mxu0 %v2457
        %2480 = vmatprep.subr.bf16.mxu0 0
        %2481 = vmatpush1.bf16.msra.mxu0 %v2456
        %2482 = vmatprep.subr.bf16.mxu0 0
        %2483 = vmatpush1.bf16.msra.mxu0 %v2455
        %2484 = vmatprep.subr.bf16.mxu0 0
        %2485 = vmatpush1.bf16.msra.mxu0 %v2454
        %2486 = vmatprep.subr.bf16.mxu0 0
        %2487 = vmatpush2.bf16.msra.mxu0 0
        %2488 = vmatprep.subr.bf16.mxu0 0
        %2489 = vmatpush2.bf16.msra.mxu0 0
        %2490 = vmatprep.subr.bf16.mxu0 0
        %2491 = vmatpush2.bf16.msra.mxu0 0
        %2492 = vmatprep.subr.bf16.mxu0 0
        %2493 = vmatpush2.bf16.msra.mxu0 0
        %2494 = vmatprep.subr.bf16.mxu0 0
        %2495 = vmatpush2.bf16.msra.mxu0 0
        %2496 = vmatprep.subr.bf16.mxu0 0
        %2497 = vmatpush2.bf16.msra.mxu0 0
        %2498 = vmatprep.subr.bf16.mxu0 0
        %2499 = vmatpush2.bf16.msra.mxu0 0
        %2500 = vmatprep.subr.bf16.mxu0 0
        %2501 = vmatpush2.bf16.msra.mxu0 0
        %2502 = vmatprep.mubr.bf16.mxu0 0
        %2503 = vmatmul.mubr.bf16.gmra.mxu0 %v2367
        %v2504 = vpop.f32.mrf.mxu0
        %v2505 = vadd.f32 %v2420, %v2504
        %v2506 = vpop.f32.mrf.mxu0
        %v2507 = vpop.f32.mrf.mxu0
        %v2508 = vadd.f32 %v2420, %v2507
        %v2509 = vpop.f32.mrf.mxu0
        %2510 = vmatprep.mubr.bf16.mxu0 0
        %2511 = vmatmul.mubr.bf16.gmra.mxu0 %v2368
        %v2512 = vpop.f32.mrf.mxu0
        %v2513 = vadd.f32 %v2420, %v2512
        %v2514 = vpop.f32.mrf.mxu0
        %v2515 = vpop.f32.mrf.mxu0
        %v2516 = vadd.f32 %v2420, %v2515
        %v2517 = vpop.f32.mrf.mxu0
        %2518 = vmatprep.mubr.bf16.mxu0 0
        %2519 = vmatmul.mubr.bf16.gmra.mxu0 %v2369
        %v2520 = vpop.f32.mrf.mxu0
        %v2521 = vadd.f32 %v2420, %v2520
        %v2522 = vpop.f32.mrf.mxu0
        %v2523 = vpop.f32.mrf.mxu0
        %v2524 = vadd.f32 %v2420, %v2523
        %v2525 = vpop.f32.mrf.mxu0
        %2526 = vmatprep.mubr.bf16.mxu0 0
        %2527 = vmatmul.mubr.bf16.gmra.mxu0 %v2370
        %v2528 = vpop.f32.mrf.mxu0
        %v2529 = vadd.f32 %v2420, %v2528
        %v2530 = vpop.f32.mrf.mxu0
        %v2531 = vpop.f32.mrf.mxu0
        %v2532 = vadd.f32 %v2420, %v2531
        %v2533 = vpop.f32.mrf.mxu0
        %2534 = vmatprep.mubr.bf16.mxu0 0
        %2535 = vmatmul.mubr.bf16.gmra.mxu0 %v2371
        %v2536 = vpop.f32.mrf.mxu0
        %v2537 = vadd.f32 %v2420, %v2536
        %v2538 = vpop.f32.mrf.mxu0
        %v2539 = vpop.f32.mrf.mxu0
        %v2540 = vadd.f32 %v2420, %v2539
        %v2541 = vpop.f32.mrf.mxu0
        %2542 = vmatprep.mubr.bf16.mxu0 0
        %2543 = vmatmul.mubr.bf16.gmra.mxu0 %v2372
        %v2544 = vpop.f32.mrf.mxu0
        %v2545 = vadd.f32 %v2420, %v2544
        %v2546 = vpop.f32.mrf.mxu0
        %v2547 = vpop.f32.mrf.mxu0
        %v2548 = vadd.f32 %v2420, %v2547
        %v2549 = vpop.f32.mrf.mxu0
        %2550 = vmatprep.mubr.bf16.mxu0 0
        %2551 = vmatmul.mubr.bf16.gmra.mxu0 %v2373
        %v2552 = vpop.f32.mrf.mxu0
        %v2553 = vadd.f32 %v2420, %v2552
        %v2554 = vpop.f32.mrf.mxu0
        %v2555 = vpop.f32.mrf.mxu0
        %v2556 = vadd.f32 %v2420, %v2555
        %v2557 = vpop.f32.mrf.mxu0
        %2558 = vmatprep.mubr.bf16.mxu0 0
        %2559 = vmatmul.mubr.bf16.gmra.mxu0 %v2374
        %v2560 = vpop.f32.mrf.mxu0
        %v2561 = vadd.f32 %v2420, %v2560
        %v2562 = vpop.f32.mrf.mxu0
        %v2563 = vpop.f32.mrf.mxu0
        %v2564 = vadd.f32 %v2420, %v2563
        %v2565 = vpop.f32.mrf.mxu0
        %2566 = vmatprep.mubr.bf16.mxu0 0
        %2567 = vmatmul.mubr.bf16.gmra.mxu0 %v2375
        %v2568 = vpop.f32.mrf.mxu0
        %v2569 = vadd.f32 %v2420, %v2568
        %v2570 = vpop.f32.mrf.mxu0
        %v2571 = vpop.f32.mrf.mxu0
        %v2572 = vadd.f32 %v2420, %v2571
        %v2573 = vpop.f32.mrf.mxu0
        %2574 = vmatprep.mubr.bf16.mxu0 0
        %2575 = vmatmul.mubr.bf16.gmra.mxu0 %v2376
        %v2576 = vpop.f32.mrf.mxu0
        %v2577 = vadd.f32 %v2420, %v2576
        %v2578 = vpop.f32.mrf.mxu0
        %v2579 = vpop.f32.mrf.mxu0
        %v2580 = vadd.f32 %v2420, %v2579
        %v2581 = vpop.f32.mrf.mxu0
        %2582 = vmatprep.mubr.bf16.mxu0 0
        %2583 = vmatmul.mubr.bf16.gmra.mxu0 %v2377
        %v2584 = vpop.f32.mrf.mxu0
        %v2585 = vadd.f32 %v2420, %v2584
        %v2586 = vpop.f32.mrf.mxu0
        %v2587 = vpop.f32.mrf.mxu0
        %v2588 = vadd.f32 %v2420, %v2587
        %v2589 = vpop.f32.mrf.mxu0
        %2590 = vmatprep.mubr.bf16.mxu0 0
        %2591 = vmatmul.mubr.bf16.gmra.mxu0 %v2378
        %v2592 = vpop.f32.mrf.mxu0
        %v2593 = vadd.f32 %v2420, %v2592
        %v2594 = vpop.f32.mrf.mxu0
        %v2595 = vpop.f32.mrf.mxu0
        %v2596 = vadd.f32 %v2420, %v2595
        %v2597 = vpop.f32.mrf.mxu0
        %2598 = vmatprep.mubr.bf16.mxu0 0
        %2599 = vmatmul.mubr.bf16.gmra.mxu0 %v2379
        %v2600 = vpop.f32.mrf.mxu0
        %v2601 = vadd.f32 %v2420, %v2600
        %v2602 = vpop.f32.mrf.mxu0
        %v2603 = vpop.f32.mrf.mxu0
        %v2604 = vadd.f32 %v2420, %v2603
        %v2605 = vpop.f32.mrf.mxu0
        %2606 = vmatprep.mubr.bf16.mxu0 0
        %2607 = vmatmul.mubr.bf16.gmra.mxu0 %v2380
        %v2608 = vpop.f32.mrf.mxu0
        %v2609 = vadd.f32 %v2420, %v2608
        %v2610 = vpop.f32.mrf.mxu0
        %v2611 = vpop.f32.mrf.mxu0
        %v2612 = vadd.f32 %v2420, %v2611
        %v2613 = vpop.f32.mrf.mxu0
        %2614 = vmatprep.mubr.bf16.mxu0 0
        %2615 = vmatmul.mubr.bf16.gmra.mxu0 %v2381
        %v2616 = vpop.f32.mrf.mxu0
        %v2617 = vadd.f32 %v2420, %v2616
        %v2618 = vpop.f32.mrf.mxu0
        %v2619 = vpop.f32.mrf.mxu0
        %v2620 = vadd.f32 %v2420, %v2619
        %v2621 = vpop.f32.mrf.mxu0
        %2622 = vmatprep.mubr.bf16.mxu0 0
        %2623 = vmatmul.mubr.bf16.gmra.mxu0 %v2382
        %v2624 = vpop.f32.mrf.mxu0
        %v2625 = vadd.f32 %v2420, %v2624
        %v2626 = vpop.f32.mrf.mxu0
        %v2627 = vpop.f32.mrf.mxu0
        %v2628 = vadd.f32 %v2420, %v2627
        %v2629 = vpop.f32.mrf.mxu0
        %2630 = vmatprep.mubr.bf16.mxu0 0
        %2631 = vmatmul.mubr.bf16.gmra.mxu0 %v2383
        %v2632 = vpop.f32.mrf.mxu0
        %v2633 = vadd.f32 %v2420, %v2632
        %v2634 = vpop.f32.mrf.mxu0
        %v2635 = vpop.f32.mrf.mxu0
        %v2636 = vadd.f32 %v2420, %v2635
        %v2637 = vpop.f32.mrf.mxu0
        %2638 = vmatprep.mubr.bf16.mxu0 0
        %2639 = vmatmul.mubr.bf16.gmra.mxu0 %v2384
        %v2640 = vpop.f32.mrf.mxu0
        %v2641 = vadd.f32 %v2420, %v2640
        %v2642 = vpop.f32.mrf.mxu0
        %v2643 = vpop.f32.mrf.mxu0
        %v2644 = vadd.f32 %v2420, %v2643
        %v2645 = vpop.f32.mrf.mxu0
        %2646 = vmatprep.mubr.bf16.mxu0 0
        %2647 = vmatmul.mubr.bf16.gmra.mxu0 %v2385
        %v2648 = vpop.f32.mrf.mxu0
        %v2649 = vadd.f32 %v2420, %v2648
        %v2650 = vpop.f32.mrf.mxu0
        %v2651 = vpop.f32.mrf.mxu0
        %v2652 = vadd.f32 %v2420, %v2651
        %v2653 = vpop.f32.mrf.mxu0
        %2654 = vmatprep.mubr.bf16.mxu0 0
        %2655 = vmatmul.mubr.bf16.gmra.mxu0 %v2386
        %v2656 = vpop.f32.mrf.mxu0
        %v2657 = vadd.f32 %v2420, %v2656
        %v2658 = vpop.f32.mrf.mxu0
        %v2659 = vpop.f32.mrf.mxu0
        %v2660 = vadd.f32 %v2420, %v2659
        %v2661 = vpop.f32.mrf.mxu0
        %2662 = vmatprep.mubr.bf16.mxu0 0
        %2663 = vmatmul.mubr.bf16.gmra.mxu0 %v2387
        %v2664 = vpop.f32.mrf.mxu0
        %v2665 = vadd.f32 %v2420, %v2664
        %v2666 = vpop.f32.mrf.mxu0
        %v2667 = vpop.f32.mrf.mxu0
        %v2668 = vadd.f32 %v2420, %v2667
        %v2669 = vpop.f32.mrf.mxu0
        %2670 = vmatprep.mubr.bf16.mxu0 0
        %2671 = vmatmul.mubr.bf16.gmra.mxu0 %v2388
        %v2672 = vpop.f32.mrf.mxu0
        %v2673 = vadd.f32 %v2420, %v2672
        %v2674 = vpop.f32.mrf.mxu0
        %v2675 = vpop.f32.mrf.mxu0
        %v2676 = vadd.f32 %v2420, %v2675
        %v2677 = vpop.f32.mrf.mxu0
        %2678 = vmatprep.mubr.bf16.mxu0 0
        %2679 = vmatmul.mubr.bf16.gmra.mxu0 %v2389
        %v2680 = vpop.f32.mrf.mxu0
        %v2681 = vadd.f32 %v2420, %v2680
        %v2682 = vpop.f32.mrf.mxu0
        %v2683 = vpop.f32.mrf.mxu0
        %v2684 = vadd.f32 %v2420, %v2683
        %v2685 = vpop.f32.mrf.mxu0
        %2686 = vmatprep.mubr.bf16.mxu0 0
        %2687 = vmatmul.mubr.bf16.gmra.mxu0 %v2390
        %v2688 = vpop.f32.mrf.mxu0
        %v2689 = vadd.f32 %v2420, %v2688
        %v2690 = vpop.f32.mrf.mxu0
        %v2691 = vpop.f32.mrf.mxu0
        %v2692 = vadd.f32 %v2420, %v2691
        %v2693 = vpop.f32.mrf.mxu0
        %2694 = vmatprep.mubr.bf16.mxu0 0
        %2695 = vmatmul.mubr.bf16.gmra.mxu0 %v2391
        %v2696 = vpop.f32.mrf.mxu0
        %v2697 = vadd.f32 %v2420, %v2696
        %v2698 = vpop.f32.mrf.mxu0
        %v2699 = vpop.f32.mrf.mxu0
        %v2700 = vadd.f32 %v2420, %v2699
        %v2701 = vpop.f32.mrf.mxu0
        %2702 = vmatprep.mubr.bf16.mxu0 0
        %2703 = vmatmul.mubr.bf16.gmra.mxu0 %v2392
        %v2704 = vpop.f32.mrf.mxu0
        %v2705 = vadd.f32 %v2420, %v2704
        %v2706 = vpop.f32.mrf.mxu0
        %v2707 = vpop.f32.mrf.mxu0
        %v2708 = vadd.f32 %v2420, %v2707
        %v2709 = vpop.f32.mrf.mxu0
        %2710 = vmatprep.mubr.bf16.mxu0 0
        %2711 = vmatmul.mubr.bf16.gmra.mxu0 %v2393
        %v2712 = vpop.f32.mrf.mxu0
        %v2713 = vadd.f32 %v2420, %v2712
        %v2714 = vpop.f32.mrf.mxu0
        %v2715 = vpop.f32.mrf.mxu0
        %v2716 = vadd.f32 %v2420, %v2715
        %v2717 = vpop.f32.mrf.mxu0
        %2718 = vmatprep.mubr.bf16.mxu0 0
        %2719 = vmatmul.mubr.bf16.gmra.mxu0 %v2394
        %v2720 = vpop.f32.mrf.mxu0
        %v2721 = vadd.f32 %v2420, %v2720
        %v2722 = vpop.f32.mrf.mxu0
        %v2723 = vpop.f32.mrf.mxu0
        %v2724 = vadd.f32 %v2420, %v2723
        %v2725 = vpop.f32.mrf.mxu0
        %2726 = vmatprep.mubr.bf16.mxu0 0
        %2727 = vmatmul.mubr.bf16.gmra.mxu0 %v2395
        %v2728 = vpop.f32.mrf.mxu0
        %v2729 = vadd.f32 %v2420, %v2728
        %v2730 = vpop.f32.mrf.mxu0
        %v2731 = vpop.f32.mrf.mxu0
        %v2732 = vadd.f32 %v2420, %v2731
        %v2733 = vpop.f32.mrf.mxu0
        %2734 = vmatprep.mubr.bf16.mxu0 0
        %2735 = vmatmul.mubr.bf16.gmra.mxu0 %v2396
        %v2736 = vpop.f32.mrf.mxu0
        %v2737 = vadd.f32 %v2420, %v2736
        %v2738 = vpop.f32.mrf.mxu0
        %v2739 = vpop.f32.mrf.mxu0
        %v2740 = vadd.f32 %v2420, %v2739
        %v2741 = vpop.f32.mrf.mxu0
        %2742 = vmatprep.mubr.bf16.mxu0 0
        %2743 = vmatmul.mubr.bf16.gmra.mxu0 %v2397
        %v2744 = vpop.f32.mrf.mxu0
        %v2745 = vadd.f32 %v2420, %v2744
        %v2746 = vpop.f32.mrf.mxu0
        %v2747 = vpop.f32.mrf.mxu0
        %v2748 = vadd.f32 %v2420, %v2747
        %v2749 = vpop.f32.mrf.mxu0
        %2750 = vmatprep.mubr.bf16.mxu0 0
        %2751 = vmatmul.mubr.bf16.gmra.mxu0 %v2398
        %v2752 = vpop.f32.mrf.mxu0
        %v2753 = vadd.f32 %v2420, %v2752
        %v2754 = vpop.f32.mrf.mxu0
        %v2755 = vpop.f32.mrf.mxu0
        %v2756 = vadd.f32 %v2420, %v2755
        %v2757 = vpop.f32.mrf.mxu0
        %2758 = vdwg.mxu0
        %2759 = vst [vmem:[%s218] sm:$0xff] %v2505
        %2760 = vst [vmem:[%s218 + $0x8] sm:$0xff] %v2508
        %2761 = vst [vmem:[%s218 + $0x10] sm:$0xff] %v2513
        %2762 = vst [vmem:[%s218 + $0x18] sm:$0xff] %v2516
        %2763 = vst [vmem:[%s218 + $0x20] sm:$0xff] %v2521
        %2764 = vst [vmem:[%s218 + $0x28] sm:$0xff] %v2524
        %2765 = vst [vmem:[%s218 + $0x30] sm:$0xff] %v2529
        %2766 = vst [vmem:[%s218 + $0x38] sm:$0xff] %v2532
        %2767 = vst [vmem:[%s218 + $0x40] sm:$0xff] %v2537
        %2768 = vst [vmem:[%s218 + $0x48] sm:$0xff] %v2540
        %2769 = vst [vmem:[%s218 + $0x50] sm:$0xff] %v2545
        %2770 = vst [vmem:[%s218 + $0x58] sm:$0xff] %v2548
        %2771 = vst [vmem:[%s218 + $0x60] sm:$0xff] %v2553
        %2772 = vst [vmem:[%s218 + $0x68] sm:$0xff] %v2556
        %2773 = vst [vmem:[%s218 + $0x70] sm:$0xff] %v2561
        %2774 = vst [vmem:[%s218 + $0x78] sm:$0xff] %v2564
        %2775 = vst [vmem:[%s218 + $0x80] sm:$0xff] %v2569
        %2776 = vst [vmem:[%s218 + $0x88] sm:$0xff] %v2572
        %2777 = vst [vmem:[%s218 + $0x90] sm:$0xff] %v2577
        %2778 = vst [vmem:[%s218 + $0x98] sm:$0xff] %v2580
        %2779 = vst [vmem:[%s218 + $0xa0] sm:$0xff] %v2585
        %2780 = vst [vmem:[%s218 + $0xa8] sm:$0xff] %v2588
        %2781 = vst [vmem:[%s218 + $0xb0] sm:$0xff] %v2593
        %2782 = vst [vmem:[%s218 + $0xb8] sm:$0xff] %v2596
        %2783 = vst [vmem:[%s218 + $0xc0] sm:$0xff] %v2601
        %2784 = vst [vmem:[%s218 + $0xc8] sm:$0xff] %v2604
        %2785 = vst [vmem:[%s218 + $0xd0] sm:$0xff] %v2609
        %2786 = vst [vmem:[%s218 + $0xd8] sm:$0xff] %v2612
        %2787 = vst [vmem:[%s218 + $0xe0] sm:$0xff] %v2617
        %2788 = vst [vmem:[%s218 + $0xe8] sm:$0xff] %v2620
        %2789 = vst [vmem:[%s218 + $0xf0] sm:$0xff] %v2625
        %2790 = vst [vmem:[%s218 + $0xf8] sm:$0xff] %v2628
        %2791 = vst [vmem:[%s218 + $0x100] sm:$0xff] %v2633
        %2792 = vst [vmem:[%s218 + $0x108] sm:$0xff] %v2636
        %2793 = vst [vmem:[%s218 + $0x110] sm:$0xff] %v2641
        %2794 = vst [vmem:[%s218 + $0x118] sm:$0xff] %v2644
        %2795 = vst [vmem:[%s218 + $0x120] sm:$0xff] %v2649
        %2796 = vst [vmem:[%s218 + $0x128] sm:$0xff] %v2652
        %2797 = vst [vmem:[%s218 + $0x130] sm:$0xff] %v2657
        %2798 = vst [vmem:[%s218 + $0x138] sm:$0xff] %v2660
        %2799 = vst [vmem:[%s218 + $0x140] sm:$0xff] %v2665
        %2800 = vst [vmem:[%s218 + $0x148] sm:$0xff] %v2668
        %2801 = vst [vmem:[%s218 + $0x150] sm:$0xff] %v2673
        %2802 = vst [vmem:[%s218 + $0x158] sm:$0xff] %v2676
        %2803 = vst [vmem:[%s218 + $0x160] sm:$0xff] %v2681
        %2804 = vst [vmem:[%s218 + $0x168] sm:$0xff] %v2684
        %2805 = vst [vmem:[%s218 + $0x170] sm:$0xff] %v2689
        %2806 = vst [vmem:[%s218 + $0x178] sm:$0xff] %v2692
        %2807 = vst [vmem:[%s218 + $0x180] sm:$0xff] %v2697
        %2808 = vst [vmem:[%s218 + $0x188] sm:$0xff] %v2700
        %2809 = vst [vmem:[%s218 + $0x190] sm:$0xff] %v2705
        %2810 = vst [vmem:[%s218 + $0x198] sm:$0xff] %v2708
        %2811 = vst [vmem:[%s218 + $0x1a0] sm:$0xff] %v2713
        %2812 = vst [vmem:[%s218 + $0x1a8] sm:$0xff] %v2716
        %2813 = vst [vmem:[%s218 + $0x1b0] sm:$0xff] %v2721
        %2814 = vst [vmem:[%s218 + $0x1b8] sm:$0xff] %v2724
        %2815 = vst [vmem:[%s218 + $0x1c0] sm:$0xff] %v2729
        %2816 = vst [vmem:[%s218 + $0x1c8] sm:$0xff] %v2732
        %2817 = vst [vmem:[%s218 + $0x1d0] sm:$0xff] %v2737
        %2818 = vst [vmem:[%s218 + $0x1d8] sm:$0xff] %v2740
        %2819 = vst [vmem:[%s218 + $0x1e0] sm:$0xff] %v2745
        %2820 = vst [vmem:[%s218 + $0x1e8] sm:$0xff] %v2748
        %2821 = vst [vmem:[%s218 + $0x1f0] sm:$0xff] %v2753
        %2822 = vst [vmem:[%s218 + $0x1f8] sm:$0xff] %v2756
        %s2823 = sand.u32 %s137, 1
        %s2824 = scalar_lea.sflag [#allocation3], %s2823
        %s2825 = sand.u32 %s137, 1
        %s2826 = smul.addr %s2825, 512
        %s2827 = scalar_lea.vmem [#allocation2], %s2826
        // Predicated region
        $region41: #{tpu_custom_call.1} parent=39 // pred_check
          %p2828 = pneg %p147
        $region42: #{tpu_custom_call.1} parent=39 // pred_check_branch
          %2830 = sbr.rel (%p2828) target = $region44
        $region43: #{tpu_custom_call.1} parent=39 // pred_region
          %s2831 = smul.u32 64, %s19
          %s2833 = ssub.s32 8192, 8192
          %2834 = vsyncadd %s2824, %s2833
          %s2835 = smul.addr %s2831, 128
          %s2836 = scalar_lea.hbm %s5, %s2835
          %s2837 = sshll.u32 %s2827, 4
          %s2838 = int_to_ptr.vmem [resolvable:$true] %s2837
          %2843 = dma.vmem_to_hbm [thread:$0]  %s2838, 8192, %s2836, %s2824, 128, 128, 8
        $region44: #{tpu_custom_call.1} parent=39 // pred_fallthru
          _
      $region40: #{tpu_custom_call.1} parent=5 // pred_fallthru
        _
      %p2844 = scmp.le.s32.totalorder 2, %s14
      // Predicated region
      $region45: #{tpu_custom_call.1} parent=5 // pred_check
        %p2845 = pneg %p2844
      $region46: #{tpu_custom_call.1} parent=5 // pred_check_branch
        %2847 = sbr.rel (%p2845) target = $region48
      $region47: #{tpu_custom_call.1} parent=5 // pred_region
        %s2848 = ssub.s32 %s14, 2
        // Predicated region
        $region49: #{tpu_custom_call.1} parent=47 // pred_check
          %p2849 = pneg %p153
        $region50: #{tpu_custom_call.1} parent=47 // pred_check_branch
          %2851 = sbr.rel (%p2849) target = $region52
        $region51: #{tpu_custom_call.1} parent=47 // pred_region
          %s2852 = sand.u32 %s138, 1
          %s2853 = scalar_lea.sflag [#allocation3], %s2852
          %s2854 = sand.u32 %s138, 1
          %s2855 = smul.addr %s2854, 512
          %s2856 = scalar_lea.vmem [#allocation2], %s2855
          %2857 = dma.done %s2853, 8192
        $region52: #{tpu_custom_call.1} parent=47 // pred_fallthru
          _
      $region48: #{tpu_custom_call.1} parent=5 // pred_fallthru
        _
    $region6: #{tpu_custom_call.1} parent=1 // loop_footer
      %s18 = sadd.s32 1, %s14
    $region7: #{tpu_custom_call.1} parent=1 // loop_footer_branch
      %13 = sbr.rel target = $region3
    $region8: #{tpu_custom_call.1} parent=1 // loop_exit
      _
    %2858 = vsyncpa [#allocation3], 1
    %s2859 = scalar_lea.sflag [#allocation3], 1
    %2860 = vsyncpa %s2859, 1

</llo_original>
